<compile_context>
chip_gen: v6e
topology: v6e:2x2x1
jax: 0.10.0
libtpu: 0.0.40
codegen_flags: <defaults>
</compile_context>

<pallas_src>
import functools

import jax
import jax.numpy as jnp
from jax import lax
from jax.experimental import pallas as pl
from jax.experimental.pallas import tpu as pltpu


def _round_up(v, m):
    return (v + m - 1) // m * m


def _cdiv(a, b):
    return (a + b - 1) // b


def _vmem_capacity_bytes():
    """Generation-aware VMEM capacity; conservative 64 MiB fallback (v7x)."""
    try:
        info = pltpu.get_tpu_info()
        cap = getattr(info, "vmem_capacity_bytes", None)
        if cap:
            return int(cap)
    except Exception:
        pass
    return 64 * 1024 * 1024


# --------------------------------------------------------------------------
# Pass 1: fused gated projection + lane-dense logits + per-tile softmax stats.
# --------------------------------------------------------------------------
def _gate_logits_kernel(x_ref, w_ref, b_ref, ww_ref, bw_ref,
                        logits_ref, stats_ref, *, d_pad, n_valid, tile_n):
    # (tile_n, L) @ (L, 2*D_pad): one fused MXU matmul for the V and U branches,
    # f32 accumulation regardless of the streaming dtype.
    h = jnp.dot(x_ref[...], w_ref[...],
                preferred_element_type=jnp.float32) + b_ref[...]
    # Lane-aligned split (d_pad is a multiple of 128): gated projection.
    g = jnp.tanh(h[:, :d_pad]) * jax.nn.sigmoid(h[:, d_pad:])   # (tile_n, D_pad) f32
    # Tiny second matmul in the streaming dtype (bf16 default) - helps v5e's
    # bf16-native MXU and halves vreg pressure; accumulation stays f32.
    g = g.astype(ww_ref.dtype)
    # Contract over D directly -> result is already (K_pad, tile_n): lane-dense
    # logits, no transpose, unmasked full-block store (for 128-multiple tiles).
    logits = lax.dot_general(
        ww_ref[...], g,
        dimension_numbers=(((1,), (1,)), ((), ())),
        preferred_element_type=jnp.float32) + bw_ref[...]
    logits_ref[...] = logits

    # Per-tile online-softmax statistics over the *valid* instance columns.
    # Only the (at most one) ragged tile at the end of N has masked columns;
    # rows beyond N hold clamped-DMA junk and must not enter the reduction.
    col = pl.program_id(0) * tile_n + lax.broadcasted_iota(
        jnp.int32, logits.shape, 1)
    masked = jnp.where(col < n_valid, logits, -jnp.inf)
    m_t = jnp.max(masked, axis=1, keepdims=True)                  # (K_pad, 1)
    l_t = jnp.sum(jnp.exp(masked - m_t), axis=1, keepdims=True)   # (K_pad, 1)
    stats_ref[...] = jnp.concatenate([m_t, l_t], axis=1)[None]    # (1, K_pad, 2)


# --------------------------------------------------------------------------
# Pass 2: combine per-tile stats into global (max, 1/sum-exp).  Tiny kernel.
# --------------------------------------------------------------------------
def _combine_stats_kernel(parts_ref, m_ref, inv_l_ref):
    parts = parts_ref[...]                          # (n_tiles, K_pad, 2) f32
    m_parts = parts[:, :, 0:1]                      # (n_tiles, K_pad, 1)
    l_parts = parts[:, :, 1:2]
    m = jnp.max(m_parts, axis=0)                    # (K_pad, 1)
    l = jnp.sum(l_parts * jnp.exp(m_parts - m[None]), axis=0)
    m_ref[...] = m
    inv_l_ref[...] = 1.0 / l                        # exact divide (K_pad values)


# --------------------------------------------------------------------------
# Pass 3: tiled, megacore-parallel normalization of the logits.
# --------------------------------------------------------------------------
def _rescale_kernel(a_ref, m_ref, inv_l_ref, out_ref):
    out_ref[...] = (jnp.exp(a_ref[...] - m_ref[...]) * inv_l_ref[...]
                    ).astype(out_ref.dtype)


# --------------------------------------------------------------------------
# Wrapper
# --------------------------------------------------------------------------
def gate_attention(x, wv, bv, wu, bu, ww, bw, *,
                   stream_dtype=jnp.bfloat16, tile_n_max=None):
    """x: (N, L); wv/wu: (D, L); bv/bu: (D,); ww: (K, D); bw: (K,) -> (K, N).

    stream_dtype: dtype used to stream x / the fused projection weight / Ww
    (bf16 by default - HBM-bandwidth lever); accumulation and the softmax
    always run in float32.
    """
    N, L = x.shape
    D = wv.shape[0]
    K = ww.shape[0]

    f32 = jnp.float32
    in_dtype = jnp.dtype(stream_dtype) if stream_dtype is not None else x.dtype
    itemsize = jnp.dtype(in_dtype).itemsize

    # Keep the fused projection MXU-filling: D_pad a multiple of 128 so the
    # fused output width (2*D_pad) is a multiple of 256 (v6e/v7x MXU width).
    D_pad = _round_up(D, 128)
    K_pad = _round_up(K, 8)

    # ---- generation-aware tile size & VMEM budget ---------------------------
    vmem_cap = _vmem_capacity_bytes()
    vmem_budget = int(0.7 * vmem_cap)
    if tile_n_max is None:
        # 8192-row tiles on 128 MiB-VMEM parts (v5e/v6e), 4096 on 64 MiB (v7x).
        tile_n_max = 8192 if vmem_cap >= 96 * 1024 * 1024 else 4096

    def _pass1_vmem(t):
        x_bufs = 2 * t * L * itemsize                       # double-buffered x
        w_res = 2 * L * (2 * D_pad) * itemsize              # fused weight
        small = 2 * ((2 * D_pad) * 4 + K_pad * D_pad * itemsize + K_pad * 4
                     + K_pad * 2 * 128 * 4)
        out_bufs = 2 * K_pad * t * 4
        interm = (t * 2 * D_pad * 4                          # h (f32)
                  + t * D_pad * (4 + itemsize)               # g (f32 + cast)
                  + 6 * K_pad * t * 4)                       # logit temporaries
        return int(1.5 * (x_bufs + w_res + small + out_bufs + interm))

    if N >= 128:
        tile_n = min(int(tile_n_max), (N // 128) * 128)      # 128-mult, <= N
        while tile_n > 128 and _pass1_vmem(tile_n) > vmem_budget:
            tile_n -= 128
    else:
        tile_n = N                                           # full-extent block
    n_tiles = _cdiv(N, tile_n)

    # ---- operands (no padded copy of x; only a dtype cast) ------------------
    x_s = x if x.dtype == in_dtype else x.astype(in_dtype)

    # Fused V/U projection weight: (L, 2*D_pad) = [Wv^T | Wu^T] (small arrays).
    w_fused = jnp.zeros((L, 2 * D_pad), in_dtype)
    w_fused = w_fused.at[:, :D].set(wv.T.astype(in_dtype))
    w_fused = w_fused.at[:, D_pad:D_pad + D].set(wu.T.astype(in_dtype))
    b_fused = jnp.zeros((1, 2 * D_pad), f32)
    b_fused = b_fused.at[0, :D].set(bv.astype(f32))
    b_fused = b_fused.at[0, D_pad:D_pad + D].set(bu.astype(f32))

    ww_p = jnp.zeros((K_pad, D_pad), in_dtype).at[:K, :D].set(ww.astype(in_dtype))
    bw_p = jnp.zeros((K_pad, 1), f32).at[:K, 0].set(bw.astype(f32))

    flops = 2 * N * L * (2 * D_pad) + 2 * N * D_pad * K_pad
    transcendentals = N * (2 * D_pad + K_pad)
    bytes_accessed = (N * L * itemsize + L * 2 * D_pad * itemsize
                      + K_pad * D_pad * itemsize
                      + K_pad * N * 4 + n_tiles * K_pad * 2 * 4)
    cost = pl.CostEstimate(flops=int(flops),
                           transcendentals=int(transcendentals),
                           bytes_accessed=int(bytes_accessed))

    kernel1 = functools.partial(_gate_logits_kernel, d_pad=D_pad,
                                n_valid=N, tile_n=tile_n)
    out_shapes1 = (jax.ShapeDtypeStruct((K_pad, N), f32),
                   jax.ShapeDtypeStruct((n_tiles, K_pad, 2), f32))
    out_specs1 = (pl.BlockSpec((K_pad, tile_n), lambda i: (0, i)),
                  pl.BlockSpec((1, K_pad, 2), lambda i: (i, 0, 0)))

    def _run_pass1(single_buffer_consts):
        def const_spec(shape):
            if single_buffer_consts:
                # Fetched once; single-buffer to free VMEM headroom.
                return pl.BlockSpec(shape, lambda i: (0,) * len(shape),
                                    pipeline_mode=pl.Buffered(1))
            return pl.BlockSpec(shape, lambda i: (0,) * len(shape))

        in_specs = [
            pl.BlockSpec((tile_n, L), lambda i: (i, 0)),
            const_spec((L, 2 * D_pad)),
            const_spec((1, 2 * D_pad)),
            const_spec((K_pad, D_pad)),
            const_spec((K_pad, 1)),
        ]
        return pl.pallas_call(
            kernel1,
            out_shape=out_shapes1,
            grid=(n_tiles,),
            in_specs=in_specs,
            out_specs=out_specs1,
            compiler_params=pltpu.CompilerParams(
                dimension_semantics=("parallel",),
                vmem_limit_bytes=vmem_budget),
            cost_estimate=cost,
        )(x_s, w_fused, b_fused, ww_p, bw_p)

    try:
        logits, stats = _run_pass1(True)
    except Exception:
        # pipeline_mode=pl.Buffered(1) unsupported on this JAX/Mosaic version.
        logits, stats = _run_pass1(False)

    # ---- pass 2: merge per-tile stats (tiny; lane-padded stats stay small) --
    vmem = pl.BlockSpec(memory_space=pltpu.MemorySpace.VMEM)
    m_glob, inv_l = pl.pallas_call(
        _combine_stats_kernel,
        out_shape=(jax.ShapeDtypeStruct((K_pad, 1), f32),
                   jax.ShapeDtypeStruct((K_pad, 1), f32)),
        in_specs=[vmem],
        out_specs=(vmem, vmem),
        compiler_params=pltpu.CompilerParams(vmem_limit_bytes=vmem_budget),
    )(stats)

    # ---- pass 3: tiled normalization, parallel over N (dual-TC on v7x) ------
    tile_r = min(32768, (N // 128) * 128) if N >= 128 else N
    out_p = pl.pallas_call(
        _rescale_kernel,
        out_shape=jax.ShapeDtypeStruct((K_pad, N), f32),
        grid=(_cdiv(N, tile_r),),
        in_specs=[
            pl.BlockSpec((K_pad, tile_r), lambda i: (0, i)),
            pl.BlockSpec((K_pad, 1), lambda i: (0, 0)),
            pl.BlockSpec((K_pad, 1), lambda i: (0, 0)),
        ],
        out_specs=pl.BlockSpec((K_pad, tile_r), lambda i: (0, i)),
        compiler_params=pltpu.CompilerParams(
            dimension_semantics=("parallel",),
            vmem_limit_bytes=min(vmem_budget, 32 * 1024 * 1024)),
    )(logits, m_glob, inv_l)

    return out_p[:K]


def gate_attention_ref(x, wv, bv, wu, bu, ww, bw):
    v = jnp.tanh(x @ wv.T + bv)
    u = jax.nn.sigmoid(x @ wu.T + bu)
    a = (v * u) @ ww.T + bw
    return jax.nn.softmax(a.T, axis=1)


if __name__ == "__main__":
    # Module defaults for L/D/K (500/128/1); small bag of N=40 instances.
    # N=40 and L=500 deliberately exercise the ragged-tile masking paths.
    N, L, D, K = 40, 500, 128, 1

    key = jax.random.PRNGKey(0)
    kx, kwv, kbv, kwu, kbu, kww, kbw = jax.random.split(key, 7)

    x = jax.random.normal(kx, (N, L), dtype=jnp.float32)
    # PyTorch Linear weight layout: (out_features, in_features).
    wv = jax.random.normal(kwv, (D, L), dtype=jnp.float32) * 0.05
    bv = jax.random.normal(kbv, (D,), dtype=jnp.float32) * 0.05
    wu = jax.random.normal(kwu, (D, L), dtype=jnp.float32) * 0.05
    bu = jax.random.normal(kbu, (D,), dtype=jnp.float32) * 0.05
    ww = jax.random.normal(kww, (K, D), dtype=jnp.float32) * 0.05
    bw = jax.random.normal(kbw, (K,), dtype=jnp.float32) * 0.05

    ref = gate_attention_ref(x, wv, bv, wu, bu, ww, bw)

    # Default path: bf16 streaming (HBM-bandwidth lever), f32 accumulation /
    # softmax; quantization of x / weights bounds the error around 1e-2.
    out = jax.block_until_ready(gate_attention(x, wv, bv, wu, bu, ww, bw))
    assert out.shape == (K, N)
    assert jnp.allclose(out, ref, atol=2e-2, rtol=2e-2), \
        float(jnp.max(jnp.abs(out - ref)))
    assert jnp.allclose(jnp.sum(out, axis=1), 1.0, atol=1e-3)

    # f32 streaming path: tight check of the kernel math (exact normalization).
    out_f32 = jax.block_until_ready(
        gate_attention(x, wv, bv, wu, bu, ww, bw, stream_dtype=jnp.float32))
    assert jnp.allclose(out_f32, ref, atol=1e-3, rtol=1e-3), \
        float(jnp.max(jnp.abs(out_f32 - ref)))
    assert jnp.allclose(jnp.sum(out_f32, axis=1), 1.0, atol=1e-4)

    print("KERNEL_OK")
</pallas_src>

<mosaic_0001>
module attributes {stable_mosaic.version = 11 : i64} {
  func.func @_gate_logits_kernel(%arg0: i32, %arg1: memref<40x500xbf16, #tpu.memory_space<vmem>>, %arg2: memref<500x256xbf16, #tpu.memory_space<vmem>>, %arg3: memref<1x256xf32, #tpu.memory_space<vmem>>, %arg4: memref<8x128xbf16, #tpu.memory_space<vmem>>, %arg5: memref<8x1xf32, #tpu.memory_space<vmem>>, %arg6: memref<8x40xf32, #tpu.memory_space<vmem>>, %arg7: memref<1x8x2xf32, #tpu.memory_space<vmem>>) attributes {dimension_semantics = [#tpu.dimension_semantics<parallel>], iteration_bounds = array<i64: 1>, scalar_prefetch = 0 : i64, scratch_operands = 0 : i64, tpu.core_type = #tpu.core_type<tc>, window_params = [{transform_indices = @transform_0, window_bounds = array<i64: 40, 500>}, {pipeline_mode = #tpu.pipeline_mode<synchronous>, transform_indices = @transform_1, window_bounds = array<i64: 500, 256>}, {pipeline_mode = #tpu.pipeline_mode<synchronous>, transform_indices = @transform_2, window_bounds = array<i64: 1, 256>}, {pipeline_mode = #tpu.pipeline_mode<synchronous>, transform_indices = @transform_3, window_bounds = array<i64: 8, 128>}, {pipeline_mode = #tpu.pipeline_mode<synchronous>, transform_indices = @transform_4, window_bounds = array<i64: 8, 1>}, {transform_indices = @transform_5, window_bounds = array<i64: 8, 40>}, {transform_indices = @transform_6, window_bounds = array<i64: 1, 8, 2>}]} {
    %c0 = arith.constant 0 : index
    %c0_0 = arith.constant 0 : index
    %0 = vector.load %arg1[%c0, %c0_0] : memref<40x500xbf16, #tpu.memory_space<vmem>>, vector<40x500xbf16>
    %c0_1 = arith.constant 0 : index
    %c0_2 = arith.constant 0 : index
    %1 = vector.load %arg2[%c0_1, %c0_2] : memref<500x256xbf16, #tpu.memory_space<vmem>>, vector<500x256xbf16>
    %cst = arith.constant dense<0.000000e+00> : vector<40x256xf32>
    %2 = tpu.matmul %0, %1, %cst {dimension_numbers = #tpu.dot_dimension_numbers<[1], [0], [0], [1], [0, 0, 1, 1], [], []>} : vector<40x500xbf16>, vector<500x256xbf16>, vector<40x256xf32> -> vector<40x256xf32>
    %c0_3 = arith.constant 0 : index
    %c0_4 = arith.constant 0 : index
    %3 = vector.load %arg3[%c0_3, %c0_4] : memref<1x256xf32, #tpu.memory_space<vmem>>, vector<1x256xf32>
    %4 = vector.broadcast %3 : vector<1x256xf32> to vector<40x256xf32>
    %5 = arith.addf %2, %4 : vector<40x256xf32>
    %6 = vector.extract_strided_slice %5 {offsets = [0, 0], sizes = [40, 128], strides = [1, 1]} : vector<40x256xf32> to vector<40x128xf32>
    %7 = math.tanh %6 : vector<40x128xf32>
    %8 = vector.extract_strided_slice %5 {offsets = [0, 128], sizes = [40, 128], strides = [1, 1]} : vector<40x256xf32> to vector<40x128xf32>
    %9 = arith.negf %8 : vector<40x128xf32>
    %10 = math.exp %9 : vector<40x128xf32>
    %cst_5 = arith.constant 1.000000e+00 : f32
    %11 = vector.broadcast %cst_5 : f32 to vector<40x128xf32>
    %12 = arith.addf %11, %10 : vector<40x128xf32>
    %13 = arith.divf %11, %12 : vector<40x128xf32>
    %14 = arith.mulf %7, %13 : vector<40x128xf32>
    %15 = arith.truncf %14 : vector<40x128xf32> to vector<40x128xbf16>
    %c0_6 = arith.constant 0 : index
    %c0_7 = arith.constant 0 : index
    %16 = vector.load %arg4[%c0_6, %c0_7] : memref<8x128xbf16, #tpu.memory_space<vmem>>, vector<8x128xbf16>
    %cst_8 = arith.constant dense<0.000000e+00> : vector<8x40xf32>
    %17 = tpu.matmul %16, %15, %cst_8 {dimension_numbers = #tpu.dot_dimension_numbers<[1], [1], [0], [0], [0, 0, 1, 0], [], []>} : vector<8x128xbf16>, vector<40x128xbf16>, vector<8x40xf32> -> vector<8x40xf32>
    %c0_9 = arith.constant 0 : index
    %c0_10 = arith.constant 0 : index
    %18 = vector.load %arg5[%c0_9, %c0_10] : memref<8x1xf32, #tpu.memory_space<vmem>>, vector<8x1xf32>
    %19 = vector.broadcast %18 : vector<8x1xf32> to vector<8x40xf32>
    %20 = arith.addf %17, %19 : vector<8x40xf32>
    %c0_11 = arith.constant 0 : index
    %c0_12 = arith.constant 0 : index
    %21 = vector.load %arg6[%c0_11, %c0_12] : memref<8x40xf32, #tpu.memory_space<vmem>>, vector<8x40xf32>
    tpu.vector_store %arg6[%c0_11, %c0_12], %20 {strides = array<i32>} : memref<8x40xf32, #tpu.memory_space<vmem>>, vector<8x40xf32>,
    %c40_i32 = arith.constant 40 : i32
    %22 = arith.muli %arg0, %c40_i32 : i32
    %23 = tpu.iota {dimensions = array<i32: 1>} : vector<8x40xi32>
    %24 = vector.broadcast %22 : i32 to vector<8x40xi32>
    %25 = arith.addi %24, %23 : vector<8x40xi32>
    %c40_i32_13 = arith.constant 40 : i32
    %26 = vector.broadcast %c40_i32_13 : i32 to vector<8x40xi32>
    %27 = arith.cmpi slt, %25, %26 : vector<8x40xi32>
    %cst_14 = arith.constant 0xFF800000 : f32
    %28 = vector.broadcast %cst_14 : f32 to vector<8x40xf32>
    %29 = arith.select %27, %20, %28 : vector<8x40xi1>, vector<8x40xf32>
    %cst_15 = arith.constant dense<0xFF800000> : vector<8xf32>
    %30 = vector.multi_reduction <maximumf>, %29, %cst_15 [1] : vector<8x40xf32> to vector<8xf32>
    %31 = vector.shape_cast %30 : vector<8xf32> to vector<8x1xf32>
    %32 = vector.broadcast %31 : vector<8x1xf32> to vector<8x40xf32>
    %33 = arith.subf %29, %32 : vector<8x40xf32>
    %34 = math.exp %33 : vector<8x40xf32>
    %cst_16 = arith.constant dense<0.000000e+00> : vector<8xf32>
    %35 = vector.multi_reduction <add>, %34, %cst_16 [1] : vector<8x40xf32> to vector<8xf32>
    %36 = vector.shape_cast %35 : vector<8xf32> to vector<8x1xf32>
    %37 = tpu.concatenate %31, %36 in 1 : vector<8x1xf32>, vector<8x1xf32> -> vector<8x2xf32>
    %38 = vector.shape_cast %37 : vector<8x2xf32> to vector<1x8x2xf32>
    %c0_17 = arith.constant 0 : index
    %c0_18 = arith.constant 0 : index
    %c0_19 = arith.constant 0 : index
    %39 = vector.load %arg7[%c0_17, %c0_18, %c0_19] : memref<1x8x2xf32, #tpu.memory_space<vmem>>, vector<1x8x2xf32>
    tpu.vector_store %arg7[%c0_17, %c0_18, %c0_19], %38 {strides = array<i32>} : memref<1x8x2xf32, #tpu.memory_space<vmem>>, vector<1x8x2xf32>,
    return
  }
  func.func @transform_0(%arg0: i32) -> (i32, i32) {
    %c0_i32 = arith.constant 0 : i32
    %c0_i32_0 = arith.constant 0 : i32
    return %arg0, %c0_i32 : i32, i32
  }
  func.func @transform_1(%arg0: i32) -> (i32, i32) {
    %c0_i32 = arith.constant 0 : i32
    %c0_i32_0 = arith.constant 0 : i32
    %c0_i32_1 = arith.constant 0 : i32
    return %c0_i32, %c0_i32_0 : i32, i32
  }
  func.func @transform_2(%arg0: i32) -> (i32, i32) {
    %c0_i32 = arith.constant 0 : i32
    %c0_i32_0 = arith.constant 0 : i32
    %c0_i32_1 = arith.constant 0 : i32
    return %c0_i32, %c0_i32_0 : i32, i32
  }
  func.func @transform_3(%arg0: i32) -> (i32, i32) {
    %c0_i32 = arith.constant 0 : i32
    %c0_i32_0 = arith.constant 0 : i32
    %c0_i32_1 = arith.constant 0 : i32
    return %c0_i32, %c0_i32_0 : i32, i32
  }
  func.func @transform_4(%arg0: i32) -> (i32, i32) {
    %c0_i32 = arith.constant 0 : i32
    %c0_i32_0 = arith.constant 0 : i32
    %c0_i32_1 = arith.constant 0 : i32
    return %c0_i32, %c0_i32_0 : i32, i32
  }
  func.func @transform_5(%arg0: i32) -> (i32, i32) {
    %c0_i32 = arith.constant 0 : i32
    %c0_i32_0 = arith.constant 0 : i32
    return %c0_i32, %arg0 : i32, i32
  }
  func.func @transform_6(%arg0: i32) -> (i32, i32, i32) {
    %c0_i32 = arith.constant 0 : i32
    %c0_i32_0 = arith.constant 0 : i32
    %c0_i32_1 = arith.constant 0 : i32
    return %arg0, %c0_i32, %c0_i32_0 : i32, i32, i32
  }
}

module attributes {stable_mosaic.version = 11 : i64} {
  func.func @_gate_logits_kernel(%arg0: i32, %arg1: memref<40x500xbf16, #tpu.memory_space<vmem>>, %arg2: memref<500x256xbf16, #tpu.memory_space<vmem>>, %arg3: memref<1x256xf32, #tpu.memory_space<vmem>>, %arg4: memref<8x128xbf16, #tpu.memory_space<vmem>>, %arg5: memref<8x1xf32, #tpu.memory_space<vmem>>, %arg6: memref<8x40xf32, #tpu.memory_space<vmem>>, %arg7: memref<1x8x2xf32, #tpu.memory_space<vmem>>) attributes {dimension_semantics = [#tpu.dimension_semantics<parallel>], iteration_bounds = array<i64: 1>, scalar_prefetch = 0 : i64, scratch_operands = 0 : i64, tpu.core_type = #tpu.core_type<tc>, window_params = [{transform_indices = @transform_0, window_bounds = array<i64: 40, 500>}, {pipeline_mode = #tpu.pipeline_mode<synchronous>, transform_indices = @transform_1, window_bounds = array<i64: 500, 256>}, {pipeline_mode = #tpu.pipeline_mode<synchronous>, transform_indices = @transform_2, window_bounds = array<i64: 1, 256>}, {pipeline_mode = #tpu.pipeline_mode<synchronous>, transform_indices = @transform_3, window_bounds = array<i64: 8, 128>}, {pipeline_mode = #tpu.pipeline_mode<synchronous>, transform_indices = @transform_4, window_bounds = array<i64: 8, 1>}, {transform_indices = @transform_5, window_bounds = array<i64: 8, 40>}, {transform_indices = @transform_6, window_bounds = array<i64: 1, 8, 2>}]} {
    %c0 = arith.constant 0 : index
    %c0_0 = arith.constant 0 : index
    %0 = vector.load %arg1[%c0, %c0_0] : memref<40x500xbf16, #tpu.memory_space<vmem>>, vector<40x500xbf16>
    %c0_1 = arith.constant 0 : index
    %c0_2 = arith.constant 0 : index
    %1 = vector.load %arg2[%c0_1, %c0_2] : memref<500x256xbf16, #tpu.memory_space<vmem>>, vector<500x256xbf16>
    %cst = arith.constant dense<0.000000e+00> : vector<40x256xf32>
    %2 = tpu.matmul %0, %1, %cst {dimension_numbers = #tpu.dot_dimension_numbers<[1], [0], [0], [1], [0, 0, 1, 1], [], []>} : vector<40x500xbf16>, vector<500x256xbf16>, vector<40x256xf32> -> vector<40x256xf32>
    %c0_3 = arith.constant 0 : index
    %c0_4 = arith.constant 0 : index
    %3 = vector.load %arg3[%c0_3, %c0_4] : memref<1x256xf32, #tpu.memory_space<vmem>>, vector<1x256xf32>
    %4 = vector.broadcast %3 : vector<1x256xf32> to vector<40x256xf32>
    %5 = arith.addf %2, %4 : vector<40x256xf32>
    %6 = vector.extract_strided_slice %5 {offsets = [0, 0], sizes = [40, 128], strides = [1, 1]} : vector<40x256xf32> to vector<40x128xf32>
    %7 = math.tanh %6 : vector<40x128xf32>
    %8 = vector.extract_strided_slice %5 {offsets = [0, 128], sizes = [40, 128], strides = [1, 1]} : vector<40x256xf32> to vector<40x128xf32>
    %9 = arith.negf %8 : vector<40x128xf32>
    %10 = math.exp %9 : vector<40x128xf32>
    %cst_5 = arith.constant 1.000000e+00 : f32
    %11 = vector.broadcast %cst_5 : f32 to vector<40x128xf32>
    %12 = arith.addf %11, %10 : vector<40x128xf32>
    %13 = arith.divf %11, %12 : vector<40x128xf32>
    %14 = arith.mulf %7, %13 : vector<40x128xf32>
    %15 = arith.truncf %14 : vector<40x128xf32> to vector<40x128xbf16>
    %c0_6 = arith.constant 0 : index
    %c0_7 = arith.constant 0 : index
    %16 = vector.load %arg4[%c0_6, %c0_7] : memref<8x128xbf16, #tpu.memory_space<vmem>>, vector<8x128xbf16>
    %cst_8 = arith.constant dense<0.000000e+00> : vector<8x40xf32>
    %17 = tpu.matmul %16, %15, %cst_8 {dimension_numbers = #tpu.dot_dimension_numbers<[1], [1], [0], [0], [0, 0, 1, 0], [], []>} : vector<8x128xbf16>, vector<40x128xbf16>, vector<8x40xf32> -> vector<8x40xf32>
    %c0_9 = arith.constant 0 : index
    %c0_10 = arith.constant 0 : index
    %18 = vector.load %arg5[%c0_9, %c0_10] : memref<8x1xf32, #tpu.memory_space<vmem>>, vector<8x1xf32>
    %19 = vector.broadcast %18 : vector<8x1xf32> to vector<8x40xf32>
    %20 = arith.addf %17, %19 : vector<8x40xf32>
    %c0_11 = arith.constant 0 : index
    %c0_12 = arith.constant 0 : index
    %21 = vector.load %arg6[%c0_11, %c0_12] : memref<8x40xf32, #tpu.memory_space<vmem>>, vector<8x40xf32>
    tpu.vector_store %arg6[%c0_11, %c0_12], %20 {strides = array<i32>} : memref<8x40xf32, #tpu.memory_space<vmem>>, vector<8x40xf32>,
    %c40_i32 = arith.constant 40 : i32
    %22 = arith.muli %arg0, %c40_i32 : i32
    %23 = tpu.iota {dimensions = array<i32: 1>} : vector<8x40xi32>
    %24 = vector.broadcast %22 : i32 to vector<8x40xi32>
    %25 = arith.addi %24, %23 : vector<8x40xi32>
    %c40_i32_13 = arith.constant 40 : i32
    %26 = vector.broadcast %c40_i32_13 : i32 to vector<8x40xi32>
    %27 = arith.cmpi slt, %25, %26 : vector<8x40xi32>
    %cst_14 = arith.constant 0xFF800000 : f32
    %28 = vector.broadcast %cst_14 : f32 to vector<8x40xf32>
    %29 = arith.select %27, %20, %28 : vector<8x40xi1>, vector<8x40xf32>
    %cst_15 = arith.constant dense<0xFF800000> : vector<8xf32>
    %30 = vector.multi_reduction <maximumf>, %29, %cst_15 [1] : vector<8x40xf32> to vector<8xf32>
    %31 = vector.shape_cast %30 : vector<8xf32> to vector<8x1xf32>
    %32 = vector.broadcast %31 : vector<8x1xf32> to vector<8x40xf32>
    %33 = arith.subf %29, %32 : vector<8x40xf32>
    %34 = math.exp %33 : vector<8x40xf32>
    %cst_16 = arith.constant dense<0.000000e+00> : vector<8xf32>
    %35 = vector.multi_reduction <add>, %34, %cst_16 [1] : vector<8x40xf32> to vector<8xf32>
    %36 = vector.shape_cast %35 : vector<8xf32> to vector<8x1xf32>
    %37 = tpu.concatenate %31, %36 in 1 : vector<8x1xf32>, vector<8x1xf32> -> vector<8x2xf32>
    %38 = vector.shape_cast %37 : vector<8x2xf32> to vector<1x8x2xf32>
    %c0_17 = arith.constant 0 : index
    %c0_18 = arith.constant 0 : index
    %c0_19 = arith.constant 0 : index
    %39 = vector.load %arg7[%c0_17, %c0_18, %c0_19] : memref<1x8x2xf32, #tpu.memory_space<vmem>>, vector<1x8x2xf32>
    tpu.vector_store %arg7[%c0_17, %c0_18, %c0_19], %38 {strides = array<i32>} : memref<1x8x2xf32, #tpu.memory_space<vmem>>, vector<1x8x2xf32>,
    return
  }
  func.func @transform_0(%arg0: i32) -> (i32, i32) {
    %c0_i32 = arith.constant 0 : i32
    %c0_i32_0 = arith.constant 0 : i32
    return %arg0, %c0_i32 : i32, i32
  }
  func.func @transform_1(%arg0: i32) -> (i32, i32) {
    %c0_i32 = arith.constant 0 : i32
    %c0_i32_0 = arith.constant 0 : i32
    %c0_i32_1 = arith.constant 0 : i32
    return %c0_i32, %c0_i32_0 : i32, i32
  }
  func.func @transform_2(%arg0: i32) -> (i32, i32) {
    %c0_i32 = arith.constant 0 : i32
    %c0_i32_0 = arith.constant 0 : i32
    %c0_i32_1 = arith.constant 0 : i32
    return %c0_i32, %c0_i32_0 : i32, i32
  }
  func.func @transform_3(%arg0: i32) -> (i32, i32) {
    %c0_i32 = arith.constant 0 : i32
    %c0_i32_0 = arith.constant 0 : i32
    %c0_i32_1 = arith.constant 0 : i32
    return %c0_i32, %c0_i32_0 : i32, i32
  }
  func.func @transform_4(%arg0: i32) -> (i32, i32) {
    %c0_i32 = arith.constant 0 : i32
    %c0_i32_0 = arith.constant 0 : i32
    %c0_i32_1 = arith.constant 0 : i32
    return %c0_i32, %c0_i32_0 : i32, i32
  }
  func.func @transform_5(%arg0: i32) -> (i32, i32) {
    %c0_i32 = arith.constant 0 : i32
    %c0_i32_0 = arith.constant 0 : i32
    return %c0_i32, %arg0 : i32, i32
  }
  func.func @transform_6(%arg0: i32) -> (i32, i32, i32) {
    %c0_i32 = arith.constant 0 : i32
    %c0_i32_0 = arith.constant 0 : i32
    %c0_i32_1 = arith.constant 0 : i32
    return %arg0, %c0_i32, %c0_i32_0 : i32, i32, i32
  }
}

</mosaic_0001>

<llo_original>
// kernel: tpu_custom_call.1
$region0: #{tpu_custom_call.1}
  #allocation0 [shape = 'u32[]', space=smem, size = 0x4, offset = 0x4, fixed_abs, tag = 'smem constant byte address 0x4 - core index']
  #allocation1 [shape = 'u32[144,128]{1,0:T(1,128)}', space=vmem, size = 0x12000, scoped, tag = 'internal scratch']
  %s0 = inlined_call_operand.hbm [shape: bf16[40,500], index: 0, kind: input, shape index: {}]
  %s1 = inlined_call_operand.hbm [shape: bf16[500,256], index: 1, kind: input, shape index: {}]
  %s2 = inlined_call_operand.vmem [shape: f32[1,256], index: 2, kind: input, shape index: {}]
  %s3 = inlined_call_operand.vmem [shape: bf16[8,128], index: 3, kind: input, shape index: {}]
  %s4 = inlined_call_operand.vmem [shape: f32[8,1], index: 4, kind: input, shape index: {}]
  %s5 = inlined_call_operand.hbm [shape: f32[8,40], index: 5, kind: output, shape index: {0}]
  %s6 = inlined_call_operand.vmem [shape: f32[1,8,2], index: 6, kind: output, shape index: {1}]
  %7 = xla_tuple %s5, %s6
  %s8 = sld [smem:[#allocation0]]
  $region46: #{tpu_custom_call.1} parent=0
    _
  %s10 = ssub.s32 1, %s8
  %s11 = scalar_select 0, %s10, %s8
  $region1: #{tpu_custom_call.1} parent=0
    #allocation2 [shape = 'u8[40960]{0}', space=vmem, size = 0xa000, scoped, tag = 'input window, operand 0, single buffered']
    #allocation3 [shape = 's32[1]{0}', space=sflag, size = 0x4, scoped, tag = 'scoped memory for tpu_custom_call.1']
    #allocation4 [shape = 's32[1]{0}', space=sflag, size = 0x4, scoped, tag = 'scoped memory for tpu_custom_call.1']
    #allocation5 [shape = 'u8[258048]{0}', space=vmem, size = 0x3f000, scoped, tag = 'input window, operand 1, single buffered']
    #allocation6 [shape = 's32[1]{0}', space=sflag, size = 0x4, scoped, tag = 'scoped memory for tpu_custom_call.1']
    #allocation7 [shape = 'u8[4096]{0}', space=vmem, size = 0x1000, scoped, tag = 'output window, operand 0, single buffered']
    %12 = vsyncpa [#allocation3], 0
    %13 = vsyncpa [#allocation6], 0
    %14 = vsyncpa [#allocation4], 0
    // Predicated region
    $region2: #{tpu_custom_call.1} parent=1 // pred_check
      _
    $region3: #{tpu_custom_call.1} parent=1 // pred_check_branch
      %16 = sbr.rel (0) target = $region5
    $region4: #{tpu_custom_call.1} parent=1 // pred_region
      %s18 = ssub.s32 1280, 1280
      %19 = vsyncadd [#allocation3], %s18
      %s20 = sshll.u32 [#allocation2], 4
      %s21 = int_to_ptr.vmem [resolvable:$true] %s20
      %26 = dma.hbm_to_vmem [thread:$0]  %s0, 1280, %s21, [#allocation3], 256, 256, 16
    $region5: #{tpu_custom_call.1} parent=1 // pred_fallthru
      _
    // Predicated region
    $region6: #{tpu_custom_call.1} parent=1 // pred_check
      _
    $region7: #{tpu_custom_call.1} parent=1 // pred_check_branch
      %28 = sbr.rel (0) target = $region9
    $region8: #{tpu_custom_call.1} parent=1 // pred_region
      %s30 = ssub.s32 8064, 8064
      %31 = vsyncadd [#allocation6], %s30
      %s32 = sshll.u32 [#allocation5], 4
      %s33 = int_to_ptr.vmem [resolvable:$true] %s32
      %38 = dma.hbm_to_vmem [thread:$0]  %s1, 8064, %s33, [#allocation6], 128, 128, 8
    $region9: #{tpu_custom_call.1} parent=1 // pred_fallthru
      _
    // Predicated region
    $region10: #{tpu_custom_call.1} parent=1 // pred_check
      _
    $region11: #{tpu_custom_call.1} parent=1 // pred_check_branch
      %40 = sbr.rel (0) target = $region13
    $region12: #{tpu_custom_call.1} parent=1 // pred_region
      _
    $region13: #{tpu_custom_call.1} parent=1 // pred_fallthru
      _
    // Predicated region
    $region14: #{tpu_custom_call.1} parent=1 // pred_check
      _
    $region15: #{tpu_custom_call.1} parent=1 // pred_check_branch
      %42 = sbr.rel (0) target = $region17
    $region16: #{tpu_custom_call.1} parent=1 // pred_region
      _
    $region17: #{tpu_custom_call.1} parent=1 // pred_fallthru
      _
    // Predicated region
    $region18: #{tpu_custom_call.1} parent=1 // pred_check
      _
    $region19: #{tpu_custom_call.1} parent=1 // pred_check_branch
      %44 = sbr.rel (0) target = $region21
    $region20: #{tpu_custom_call.1} parent=1 // pred_region
      _
    $region21: #{tpu_custom_call.1} parent=1 // pred_fallthru
      _
    // Predicated region
    $region22: #{tpu_custom_call.1} parent=1 // pred_check
      _
    $region23: #{tpu_custom_call.1} parent=1 // pred_check_branch
      %46 = sbr.rel (0) target = $region25
    $region24: #{tpu_custom_call.1} parent=1 // pred_region
      %47 = dma.done [#allocation3], 1280
    $region25: #{tpu_custom_call.1} parent=1 // pred_fallthru
      _
    // Predicated region
    $region26: #{tpu_custom_call.1} parent=1 // pred_check
      _
    $region27: #{tpu_custom_call.1} parent=1 // pred_check_branch
      %49 = sbr.rel (0) target = $region29
    $region28: #{tpu_custom_call.1} parent=1 // pred_region
      %50 = dma.done [#allocation6], 8064
    $region29: #{tpu_custom_call.1} parent=1 // pred_fallthru
      _
    %v52 = vld [vmem:[#allocation2] sm:$0xff]
    %v53 = vld [vmem:[#allocation2 + $0x8] sm:$0xff]
    %v54 = vld [vmem:[#allocation2 + $0x10] sm:$0xff]
    %v55 = vld [vmem:[#allocation2 + $0x18] sm:$0xff]
    %v56 = vld [vmem:[#allocation2 + $0x20] sm:$0xff]
    %v57 = vld [vmem:[#allocation2 + $0x28] sm:$0xff]
    %v58 = vld [vmem:[#allocation2 + $0x30] sm:$0xff]
    %v59 = vld [vmem:[#allocation2 + $0x38] sm:$0xff]
    %v60 = vld [vmem:[#allocation2 + $0x40] sm:$0xff]
    %v61 = vld [vmem:[#allocation2 + $0x48] sm:$0xff]
    %v62 = vld [vmem:[#allocation5] sm:$0xff]
    %v63 = vld [vmem:[#allocation5 + $0x8] sm:$0xff]
    %v64 = vld [vmem:[#allocation5 + $0x10] sm:$0xff]
    %v65 = vld [vmem:[#allocation5 + $0x18] sm:$0xff]
    %v66 = vld [vmem:[#allocation5 + $0x20] sm:$0xff]
    %v67 = vld [vmem:[#allocation5 + $0x28] sm:$0xff]
    %v68 = vld [vmem:[#allocation5 + $0x30] sm:$0xff]
    %v69 = vld [vmem:[#allocation5 + $0x38] sm:$0xff]
    %v70 = vld [vmem:[#allocation5 + $0x40] sm:$0xff]
    %v71 = vld [vmem:[#allocation5 + $0x48] sm:$0xff]
    %v72 = vld [vmem:[#allocation5 + $0x50] sm:$0xff]
    %v73 = vld [vmem:[#allocation5 + $0x58] sm:$0xff]
    %v74 = vld [vmem:[#allocation5 + $0x60] sm:$0xff]
    %v75 = vld [vmem:[#allocation5 + $0x68] sm:$0xff]
    %v76 = vld [vmem:[#allocation5 + $0x70] sm:$0xff]
    %v77 = vld [vmem:[#allocation5 + $0x78] sm:$0xff]
    %v78 = vld [vmem:[#allocation5 + $0x80] sm:$0xff]
    %v79 = vld [vmem:[#allocation5 + $0x88] sm:$0xff]
    %v80 = vld [vmem:[#allocation5 + $0x90] sm:$0xff]
    %v81 = vld [vmem:[#allocation5 + $0x98] sm:$0xff]
    %v82 = vld [vmem:[#allocation5 + $0xa0] sm:$0xff]
    %v83 = vld [vmem:[#allocation5 + $0xa8] sm:$0xff]
    %v84 = vld [vmem:[#allocation5 + $0xb0] sm:$0xff]
    %v85 = vld [vmem:[#allocation5 + $0xb8] sm:$0xff]
    %v86 = vld [vmem:[#allocation5 + $0xc0] sm:$0xff]
    %v87 = vld [vmem:[#allocation5 + $0xc8] sm:$0xff]
    %v88 = vld [vmem:[#allocation5 + $0xd0] sm:$0xff]
    %v89 = vld [vmem:[#allocation5 + $0xd8] sm:$0xff]
    %v90 = vld [vmem:[#allocation5 + $0xe0] sm:$0xff]
    %v91 = vld [vmem:[#allocation5 + $0xe8] sm:$0xff]
    %v92 = vld [vmem:[#allocation5 + $0xf0] sm:$0xff]
    %v93 = vld [vmem:[#allocation5 + $0xf8] sm:$0xff]
    %v94 = vld [vmem:[#allocation5 + $0x100] sm:$0xff]
    %v95 = vld [vmem:[#allocation5 + $0x108] sm:$0xff]
    %v96 = vld [vmem:[#allocation5 + $0x110] sm:$0xff]
    %v97 = vld [vmem:[#allocation5 + $0x118] sm:$0xff]
    %v98 = vld [vmem:[#allocation5 + $0x120] sm:$0xff]
    %v99 = vld [vmem:[#allocation5 + $0x128] sm:$0xff]
    %v100 = vld [vmem:[#allocation5 + $0x130] sm:$0xff]
    %v101 = vld [vmem:[#allocation5 + $0x138] sm:$0xff]
    %v102 = vld [vmem:[#allocation5 + $0x140] sm:$0xff]
    %v103 = vld [vmem:[#allocation5 + $0x148] sm:$0xff]
    %v104 = vld [vmem:[#allocation5 + $0x150] sm:$0xff]
    %v105 = vld [vmem:[#allocation5 + $0x158] sm:$0xff]
    %v106 = vld [vmem:[#allocation5 + $0x160] sm:$0xff]
    %v107 = vld [vmem:[#allocation5 + $0x168] sm:$0xff]
    %v108 = vld [vmem:[#allocation5 + $0x170] sm:$0xff]
    %v109 = vld [vmem:[#allocation5 + $0x178] sm:$0xff]
    %v110 = vld [vmem:[#allocation5 + $0x180] sm:$0xff]
    %v111 = vld [vmem:[#allocation5 + $0x188] sm:$0xff]
    %v112 = vld [vmem:[#allocation5 + $0x190] sm:$0xff]
    %v113 = vld [vmem:[#allocation5 + $0x198] sm:$0xff]
    %v114 = vld [vmem:[#allocation5 + $0x1a0] sm:$0xff]
    %v115 = vld [vmem:[#allocation5 + $0x1a8] sm:$0xff]
    %v116 = vld [vmem:[#allocation5 + $0x1b0] sm:$0xff]
    %v117 = vld [vmem:[#allocation5 + $0x1b8] sm:$0xff]
    %v118 = vld [vmem:[#allocation5 + $0x1c0] sm:$0xff]
    %v119 = vld [vmem:[#allocation5 + $0x1c8] sm:$0xff]
    %v120 = vld [vmem:[#allocation5 + $0x1d0] sm:$0xff]
    %v121 = vld [vmem:[#allocation5 + $0x1d8] sm:$0xff]
    %v122 = vld [vmem:[#allocation5 + $0x1e0] sm:$0xff]
    %v123 = vld [vmem:[#allocation5 + $0x1e8] sm:$0xff]
    %v124 = vld [vmem:[#allocation5 + $0x1f0] sm:$0x33]
    %v125 = vld [vmem:[%s2] sm:$0x3]
    %v127 = vlaneseq
    %v128 = vshrl.u32 %v127, 7
    %v129 = vsub.s32 0, %v128
    %v130 = vrot.slane %v125, %v129
    %v131 = vlaneseq
    %v132 = vshrl.u32 %v131, 7
    %v133 = vsub.s32 1, %v132
    %v134 = vrot.slane %v125, %v133
    %v147 = vunpack.c.l.b16 %v52
    %v148 = vunpack.c.h.b16 %v52
    %v149 = vunpack.c.l.b16 %v53
    %v150 = vunpack.c.h.b16 %v53
    %v151 = vunpack.c.l.b16 %v54
    %v152 = vunpack.c.h.b16 %v54
    %v153 = vunpack.c.l.b16 %v55
    %v154 = vunpack.c.h.b16 %v55
    %v155 = vunpack.c.l.b16 %v56
    %v156 = vunpack.c.h.b16 %v56
    %v157 = vunpack.c.l.b16 %v57
    %v158 = vunpack.c.h.b16 %v57
    %v159 = vunpack.c.l.b16 %v58
    %v160 = vunpack.c.h.b16 %v58
    %v161 = vunpack.c.l.b16 %v59
    %v162 = vunpack.c.h.b16 %v59
    %v163 = vunpack.c.l.b16 %v60
    %v164 = vunpack.c.h.b16 %v60
    %v165 = vunpack.c.l.b16 %v61
    %v166 = vunpack.c.h.b16 %v61
    %v167 = vpack.c.b16 %v151, %v147
    %v168 = vpack.c.b16 %v152, %v148
    %v169 = vpack.c.b16 %v153, %v149
    %v170 = vpack.c.b16 %v154, %v150
    %v171 = vpack.c.b16 %v159, %v155
    %v172 = vpack.c.b16 %v160, %v156
    %v173 = vpack.c.b16 %v161, %v157
    %v174 = vpack.c.b16 %v162, %v158
    %v175 = vpack.c.b16 %v163, %v163
    %v176 = vpack.c.b16 %v164, %v164
    %v177 = vpack.c.b16 %v165, %v165
    %v178 = vpack.c.b16 %v166, %v166
    %v251 = vunpack.c.l.b16 %v62
    %v252 = vunpack.c.h.b16 %v62
    %v253 = vunpack.c.l.b16 %v63
    %v254 = vunpack.c.h.b16 %v63
    %v255 = vunpack.c.l.b16 %v64
    %v256 = vunpack.c.h.b16 %v64
    %v257 = vunpack.c.l.b16 %v65
    %v258 = vunpack.c.h.b16 %v65
    %v259 = vunpack.c.l.b16 %v66
    %v260 = vunpack.c.h.b16 %v66
    %v261 = vunpack.c.l.b16 %v67
    %v262 = vunpack.c.h.b16 %v67
    %v263 = vunpack.c.l.b16 %v68
    %v264 = vunpack.c.h.b16 %v68
    %v265 = vunpack.c.l.b16 %v69
    %v266 = vunpack.c.h.b16 %v69
    %v267 = vunpack.c.l.b16 %v70
    %v268 = vunpack.c.h.b16 %v70
    %v269 = vunpack.c.l.b16 %v71
    %v270 = vunpack.c.h.b16 %v71
    %v271 = vunpack.c.l.b16 %v72
    %v272 = vunpack.c.h.b16 %v72
    %v273 = vunpack.c.l.b16 %v73
    %v274 = vunpack.c.h.b16 %v73
    %v275 = vunpack.c.l.b16 %v74
    %v276 = vunpack.c.h.b16 %v74
    %v277 = vunpack.c.l.b16 %v75
    %v278 = vunpack.c.h.b16 %v75
    %v279 = vunpack.c.l.b16 %v76
    %v280 = vunpack.c.h.b16 %v76
    %v281 = vunpack.c.l.b16 %v77
    %v282 = vunpack.c.h.b16 %v77
    %v283 = vunpack.c.l.b16 %v78
    %v284 = vunpack.c.h.b16 %v78
    %v285 = vunpack.c.l.b16 %v79
    %v286 = vunpack.c.h.b16 %v79
    %v287 = vunpack.c.l.b16 %v80
    %v288 = vunpack.c.h.b16 %v80
    %v289 = vunpack.c.l.b16 %v81
    %v290 = vunpack.c.h.b16 %v81
    %v291 = vunpack.c.l.b16 %v82
    %v292 = vunpack.c.h.b16 %v82
    %v293 = vunpack.c.l.b16 %v83
    %v294 = vunpack.c.h.b16 %v83
    %v295 = vunpack.c.l.b16 %v84
    %v296 = vunpack.c.h.b16 %v84
    %v297 = vunpack.c.l.b16 %v85
    %v298 = vunpack.c.h.b16 %v85
    %v299 = vunpack.c.l.b16 %v86
    %v300 = vunpack.c.h.b16 %v86
    %v301 = vunpack.c.l.b16 %v87
    %v302 = vunpack.c.h.b16 %v87
    %v303 = vunpack.c.l.b16 %v88
    %v304 = vunpack.c.h.b16 %v88
    %v305 = vunpack.c.l.b16 %v89
    %v306 = vunpack.c.h.b16 %v89
    %v307 = vunpack.c.l.b16 %v90
    %v308 = vunpack.c.h.b16 %v90
    %v309 = vunpack.c.l.b16 %v91
    %v310 = vunpack.c.h.b16 %v91
    %v311 = vunpack.c.l.b16 %v92
    %v312 = vunpack.c.h.b16 %v92
    %v313 = vunpack.c.l.b16 %v93
    %v314 = vunpack.c.h.b16 %v93
    %v315 = vunpack.c.l.b16 %v94
    %v316 = vunpack.c.h.b16 %v94
    %v317 = vunpack.c.l.b16 %v95
    %v318 = vunpack.c.h.b16 %v95
    %v319 = vunpack.c.l.b16 %v96
    %v320 = vunpack.c.h.b16 %v96
    %v321 = vunpack.c.l.b16 %v97
    %v322 = vunpack.c.h.b16 %v97
    %v323 = vunpack.c.l.b16 %v98
    %v324 = vunpack.c.h.b16 %v98
    %v325 = vunpack.c.l.b16 %v99
    %v326 = vunpack.c.h.b16 %v99
    %v327 = vunpack.c.l.b16 %v100
    %v328 = vunpack.c.h.b16 %v100
    %v329 = vunpack.c.l.b16 %v101
    %v330 = vunpack.c.h.b16 %v101
    %v331 = vunpack.c.l.b16 %v102
    %v332 = vunpack.c.h.b16 %v102
    %v333 = vunpack.c.l.b16 %v103
    %v334 = vunpack.c.h.b16 %v103
    %v335 = vunpack.c.l.b16 %v104
    %v336 = vunpack.c.h.b16 %v104
    %v337 = vunpack.c.l.b16 %v105
    %v338 = vunpack.c.h.b16 %v105
    %v339 = vunpack.c.l.b16 %v106
    %v340 = vunpack.c.h.b16 %v106
    %v341 = vunpack.c.l.b16 %v107
    %v342 = vunpack.c.h.b16 %v107
    %v343 = vunpack.c.l.b16 %v108
    %v344 = vunpack.c.h.b16 %v108
    %v345 = vunpack.c.l.b16 %v109
    %v346 = vunpack.c.h.b16 %v109
    %v347 = vunpack.c.l.b16 %v110
    %v348 = vunpack.c.h.b16 %v110
    %v349 = vunpack.c.l.b16 %v111
    %v350 = vunpack.c.h.b16 %v111
    %v351 = vunpack.c.l.b16 %v112
    %v352 = vunpack.c.h.b16 %v112
    %v353 = vunpack.c.l.b16 %v113
    %v354 = vunpack.c.h.b16 %v113
    %v355 = vunpack.c.l.b16 %v114
    %v356 = vunpack.c.h.b16 %v114
    %v357 = vunpack.c.l.b16 %v115
    %v358 = vunpack.c.h.b16 %v115
    %v359 = vunpack.c.l.b16 %v116
    %v360 = vunpack.c.h.b16 %v116
    %v361 = vunpack.c.l.b16 %v117
    %v362 = vunpack.c.h.b16 %v117
    %v363 = vunpack.c.l.b16 %v118
    %v364 = vunpack.c.h.b16 %v118
    %v365 = vunpack.c.l.b16 %v119
    %v366 = vunpack.c.h.b16 %v119
    %v367 = vunpack.c.l.b16 %v120
    %v368 = vunpack.c.h.b16 %v120
    %v369 = vunpack.c.l.b16 %v121
    %v370 = vunpack.c.h.b16 %v121
    %v371 = vunpack.c.l.b16 %v122
    %v372 = vunpack.c.h.b16 %v122
    %v373 = vunpack.c.l.b16 %v123
    %v374 = vunpack.c.h.b16 %v123
    %v375 = vunpack.c.l.b16 %v124
    %v376 = vunpack.c.h.b16 %v124
    %v377 = vpack.c.b16 %v253, %v251
    %v378 = vpack.c.b16 %v254, %v252
    %v379 = vpack.c.b16 %v257, %v255
    %v380 = vpack.c.b16 %v258, %v256
    %v381 = vpack.c.b16 %v261, %v259
    %v382 = vpack.c.b16 %v262, %v260
    %v383 = vpack.c.b16 %v265, %v263
    %v384 = vpack.c.b16 %v266, %v264
    %v385 = vpack.c.b16 %v269, %v267
    %v386 = vpack.c.b16 %v270, %v268
    %v387 = vpack.c.b16 %v273, %v271
    %v388 = vpack.c.b16 %v274, %v272
    %v389 = vpack.c.b16 %v277, %v275
    %v390 = vpack.c.b16 %v278, %v276
    %v391 = vpack.c.b16 %v281, %v279
    %v392 = vpack.c.b16 %v282, %v280
    %v393 = vpack.c.b16 %v285, %v283
    %v394 = vpack.c.b16 %v286, %v284
    %v395 = vpack.c.b16 %v289, %v287
    %v396 = vpack.c.b16 %v290, %v288
    %v397 = vpack.c.b16 %v293, %v291
    %v398 = vpack.c.b16 %v294, %v292
    %v399 = vpack.c.b16 %v297, %v295
    %v400 = vpack.c.b16 %v298, %v296
    %v401 = vpack.c.b16 %v301, %v299
    %v402 = vpack.c.b16 %v302, %v300
    %v403 = vpack.c.b16 %v305, %v303
    %v404 = vpack.c.b16 %v306, %v304
    %v405 = vpack.c.b16 %v309, %v307
    %v406 = vpack.c.b16 %v310, %v308
    %v407 = vpack.c.b16 %v313, %v311
    %v408 = vpack.c.b16 %v314, %v312
    %v409 = vpack.c.b16 %v317, %v315
    %v410 = vpack.c.b16 %v318, %v316
    %v411 = vpack.c.b16 %v321, %v319
    %v412 = vpack.c.b16 %v322, %v320
    %v413 = vpack.c.b16 %v325, %v323
    %v414 = vpack.c.b16 %v326, %v324
    %v415 = vpack.c.b16 %v329, %v327
    %v416 = vpack.c.b16 %v330, %v328
    %v417 = vpack.c.b16 %v333, %v331
    %v418 = vpack.c.b16 %v334, %v332
    %v419 = vpack.c.b16 %v337, %v335
    %v420 = vpack.c.b16 %v338, %v336
    %v421 = vpack.c.b16 %v341, %v339
    %v422 = vpack.c.b16 %v342, %v340
    %v423 = vpack.c.b16 %v345, %v343
    %v424 = vpack.c.b16 %v346, %v344
    %v425 = vpack.c.b16 %v349, %v347
    %v426 = vpack.c.b16 %v350, %v348
    %v427 = vpack.c.b16 %v353, %v351
    %v428 = vpack.c.b16 %v354, %v352
    %v429 = vpack.c.b16 %v357, %v355
    %v430 = vpack.c.b16 %v358, %v356
    %v431 = vpack.c.b16 %v361, %v359
    %v432 = vpack.c.b16 %v362, %v360
    %v433 = vpack.c.b16 %v365, %v363
    %v434 = vpack.c.b16 %v366, %v364
    %v435 = vpack.c.b16 %v369, %v367
    %v436 = vpack.c.b16 %v370, %v368
    %v437 = vpack.c.b16 %v373, %v371
    %v438 = vpack.c.b16 %v374, %v372
    %v439 = vpack.c.b16 %v375, %v375
    %v440 = vpack.c.b16 %v376, %v376
    %vm503 = vcmask 949248
    %v505 = vsel %vm503, %v170, 0
    %v508 = vsel %vm503, %v174, 0
    %v511 = vsel %vm503, %v178, 0
    %vm513 = vcmask 1041408
    %v515 = vsel %vm513, %v439, 0
    %v518 = vsel %vm513, %v440, 0
    %520 = vmatprep.subr.bf16.mxu0 %v392
    %521 = vmatpush1.bf16.msra.mxu0 %v391
    %522 = vmatprep.subr.bf16.mxu0 %v390
    %523 = vmatpush1.bf16.msra.mxu0 %v389
    %524 = vmatprep.subr.bf16.mxu0 %v388
    %525 = vmatpush1.bf16.msra.mxu0 %v387
    %526 = vmatprep.subr.bf16.mxu0 %v386
    %527 = vmatpush1.bf16.msra.mxu0 %v385
    %528 = vmatprep.subr.bf16.mxu0 %v384
    %529 = vmatpush1.bf16.msra.mxu0 %v383
    %530 = vmatprep.subr.bf16.mxu0 %v382
    %531 = vmatpush1.bf16.msra.mxu0 %v381
    %532 = vmatprep.subr.bf16.mxu0 %v380
    %533 = vmatpush1.bf16.msra.mxu0 %v379
    %534 = vmatprep.subr.bf16.mxu0 %v378
    %535 = vmatpush1.bf16.msra.mxu0 %v377
    %536 = vmatprep.subr.bf16.mxu0 %v408
    %537 = vmatpush2.bf16.msra.mxu0 %v407
    %538 = vmatprep.subr.bf16.mxu0 %v406
    %539 = vmatpush2.bf16.msra.mxu0 %v405
    %540 = vmatprep.subr.bf16.mxu0 %v404
    %541 = vmatpush2.bf16.msra.mxu0 %v403
    %542 = vmatprep.subr.bf16.mxu0 %v402
    %543 = vmatpush2.bf16.msra.mxu0 %v401
    %544 = vmatprep.subr.bf16.mxu0 %v400
    %545 = vmatpush2.bf16.msra.mxu0 %v399
    %546 = vmatprep.subr.bf16.mxu0 %v398
    %547 = vmatpush2.bf16.msra.mxu0 %v397
    %548 = vmatprep.subr.bf16.mxu0 %v396
    %549 = vmatpush2.bf16.msra.mxu0 %v395
    %550 = vmatprep.subr.bf16.mxu0 %v394
    %551 = vmatpush2.bf16.msra.mxu0 %v393
    %552 = vmatprep.mubr.bf16.mxu0 %v168
    %553 = vmatmul.mubr.bf16.gmra.mxu0 %v167
    %v554 = vpop.f32.mrf.mxu0
    %v555 = vadd.f32 %v130, %v554
    %v556 = vpop.f32.mrf.mxu0
    %v557 = vadd.f32 %v134, %v556
    %v558 = vpop.f32.mrf.mxu0
    %v559 = vadd.f32 %v130, %v558
    %v560 = vpop.f32.mrf.mxu0
    %v561 = vadd.f32 %v134, %v560
    %562 = vmatprep.mubr.bf16.mxu0 %v172
    %563 = vmatmul.mubr.bf16.gmra.mxu0 %v171
    %v564 = vpop.f32.mrf.mxu0
    %v565 = vadd.f32 %v130, %v564
    %v566 = vpop.f32.mrf.mxu0
    %v567 = vadd.f32 %v134, %v566
    %v568 = vpop.f32.mrf.mxu0
    %v569 = vadd.f32 %v130, %v568
    %v570 = vpop.f32.mrf.mxu0
    %v571 = vadd.f32 %v134, %v570
    %572 = vmatprep.mubr.bf16.mxu0 %v176
    %573 = vmatmul.mubr.bf16.gmra.mxu0 %v175
    %v574 = vpop.f32.mrf.mxu0
    %v575 = vadd.f32 %v130, %v574
    %v576 = vpop.f32.mrf.mxu0
    %v577 = vadd.f32 %v134, %v576
    %v578 = vpop.f32.mrf.mxu0
    %v579 = vpop.f32.mrf.mxu0
    %580 = vdwg.mxu0
    %581 = vmatprep.subr.bf16.mxu0 %v424
    %582 = vmatpush1.bf16.msra.mxu0 %v423
    %583 = vmatprep.subr.bf16.mxu0 %v422
    %584 = vmatpush1.bf16.msra.mxu0 %v421
    %585 = vmatprep.subr.bf16.mxu0 %v420
    %586 = vmatpush1.bf16.msra.mxu0 %v419
    %587 = vmatprep.subr.bf16.mxu0 %v418
    %588 = vmatpush1.bf16.msra.mxu0 %v417
    %589 = vmatprep.subr.bf16.mxu0 %v416
    %590 = vmatpush1.bf16.msra.mxu0 %v415
    %591 = vmatprep.subr.bf16.mxu0 %v414
    %592 = vmatpush1.bf16.msra.mxu0 %v413
    %593 = vmatprep.subr.bf16.mxu0 %v412
    %594 = vmatpush1.bf16.msra.mxu0 %v411
    %595 = vmatprep.subr.bf16.mxu0 %v410
    %596 = vmatpush1.bf16.msra.mxu0 %v409
    %597 = vmatprep.subr.bf16.mxu0 %v518
    %598 = vmatpush2.bf16.msra.mxu0 %v515
    %599 = vmatprep.subr.bf16.mxu0 %v438
    %600 = vmatpush2.bf16.msra.mxu0 %v437
    %601 = vmatprep.subr.bf16.mxu0 %v436
    %602 = vmatpush2.bf16.msra.mxu0 %v435
    %603 = vmatprep.subr.bf16.mxu0 %v434
    %604 = vmatpush2.bf16.msra.mxu0 %v433
    %605 = vmatprep.subr.bf16.mxu0 %v432
    %606 = vmatpush2.bf16.msra.mxu0 %v431
    %607 = vmatprep.subr.bf16.mxu0 %v430
    %608 = vmatpush2.bf16.msra.mxu0 %v429
    %609 = vmatprep.subr.bf16.mxu0 %v428
    %610 = vmatpush2.bf16.msra.mxu0 %v427
    %611 = vmatprep.subr.bf16.mxu0 %v426
    %612 = vmatpush2.bf16.msra.mxu0 %v425
    %613 = vmatprep.mubr.bf16.mxu0 %v505
    %614 = vmatmul.mubr.bf16.gmra.mxu0 %v169
    %v615 = vpop.f32.mrf.mxu0
    %v616 = vadd.f32 %v555, %v615
    %v617 = vpop.f32.mrf.mxu0
    %v618 = vadd.f32 %v557, %v617
    %v619 = vpop.f32.mrf.mxu0
    %v620 = vadd.f32 %v559, %v619
    %v621 = vpop.f32.mrf.mxu0
    %v622 = vadd.f32 %v561, %v621
    %623 = vmatprep.mubr.bf16.mxu0 %v508
    %624 = vmatmul.mubr.bf16.gmra.mxu0 %v173
    %v625 = vpop.f32.mrf.mxu0
    %v626 = vadd.f32 %v565, %v625
    %v627 = vpop.f32.mrf.mxu0
    %v628 = vadd.f32 %v567, %v627
    %v629 = vpop.f32.mrf.mxu0
    %v630 = vadd.f32 %v569, %v629
    %v631 = vpop.f32.mrf.mxu0
    %v632 = vadd.f32 %v571, %v631
    %633 = vmatprep.mubr.bf16.mxu0 %v511
    %634 = vmatmul.mubr.bf16.gmra.mxu0 %v177
    %v635 = vpop.f32.mrf.mxu0
    %v636 = vadd.f32 %v575, %v635
    %v637 = vpop.f32.mrf.mxu0
    %v638 = vadd.f32 %v577, %v637
    %v639 = vpop.f32.mrf.mxu0
    %v640 = vpop.f32.mrf.mxu0
    %641 = vdwg.mxu0
    %v642 = vtanh.pop %v616
    %v643 = vtanh.pop %v620
    %v644 = vtanh.pop %v626
    %v645 = vtanh.pop %v630
    %v646 = vtanh.pop %v636
    %v647 = vxor.u32 %v618, 2147483648
    %v648 = vxor.u32 %v622, 2147483648
    %v649 = vxor.u32 %v628, 2147483648
    %v650 = vxor.u32 %v632, 2147483648
    %v651 = vxor.u32 %v638, 2147483648
    %v652 = vmul.f32 %v647, 1.442695
    %v653 = vpow.pop %v652
    %v654 = vmul.f32 %v648, 1.442695
    %v655 = vpow.pop %v654
    %v656 = vmul.f32 %v649, 1.442695
    %v657 = vpow.pop %v656
    %v658 = vmul.f32 %v650, 1.442695
    %v659 = vpow.pop %v658
    %v660 = vmul.f32 %v651, 1.442695
    %v661 = vpow.pop %v660
    %v662 = vadd.f32 %v653, 1.0
    %v663 = vadd.f32 %v655, 1.0
    %v664 = vadd.f32 %v657, 1.0
    %v665 = vadd.f32 %v659, 1.0
    %v666 = vadd.f32 %v661, 1.0
    %v667 = vrcp.pop %v662
    %v668 = vmul.f32 1.0, %v667
    %v669 = vrcp.pop %v663
    %v670 = vmul.f32 1.0, %v669
    %v671 = vrcp.pop %v664
    %v672 = vmul.f32 1.0, %v671
    %v673 = vrcp.pop %v665
    %v674 = vmul.f32 1.0, %v673
    %v675 = vrcp.pop %v666
    %v676 = vmul.f32 1.0, %v675
    %v677 = vmul.f32 %v642, %v668
    %v678 = vmul.f32 %v643, %v670
    %v679 = vmul.f32 %v644, %v672
    %v680 = vmul.f32 %v645, %v674
    %v681 = vmul.f32 %v646, %v676
    %v682 = vpack.c.bf16 %v678, %v677
    %v683 = vpack.c.bf16 %v680, %v679
    %v684 = vpack.c.bf16 %v681, %v681
    %v685 = vld [vmem:[%s3] sm:$0xf]
    %v686 = vld [vmem:[%s4] sm:$0xff]
    %688 = vset.pattern.permute.xlu0 0
    %689 = vperm.xlu0 %688, %v686
    %v690 = vpop.permute.xlu0 %689
    %692 = vmatprep.subr.bf16.mxu0 0
    %693 = vmatpush1.bf16.xpose.msra.mxu0 0
    %694 = vmatprep.subr.bf16.mxu0 0
    %695 = vmatpush1.bf16.xpose.msra.mxu0 0
    %696 = vmatprep.subr.bf16.mxu0 0
    %697 = vmatpush1.bf16.xpose.msra.mxu0 0
    %698 = vmatprep.subr.bf16.mxu0 0
    %699 = vmatpush1.bf16.xpose.msra.mxu0 0
    %700 = vmatprep.subr.bf16.mxu0 0
    %701 = vmatpush1.bf16.xpose.msra.mxu0 0
    %702 = vmatprep.subr.bf16.mxu0 0
    %703 = vmatpush1.bf16.xpose.msra.mxu0 %v684
    %704 = vmatprep.subr.bf16.mxu0 0
    %705 = vmatpush1.bf16.xpose.msra.mxu0 %v683
    %706 = vmatprep.subr.bf16.mxu0 0
    %707 = vmatpush1.bf16.xpose.msra.mxu0 %v682
    %708 = vmatprep.subr.bf16.mxu0 0
    %709 = vmatpush2.bf16.xpose.msra.mxu0 0
    %710 = vmatprep.subr.bf16.mxu0 0
    %711 = vmatpush2.bf16.xpose.msra.mxu0 0
    %712 = vmatprep.subr.bf16.mxu0 0
    %713 = vmatpush2.bf16.xpose.msra.mxu0 0
    %714 = vmatprep.subr.bf16.mxu0 0
    %715 = vmatpush2.bf16.xpose.msra.mxu0 0
    %716 = vmatprep.subr.bf16.mxu0 0
    %717 = vmatpush2.bf16.xpose.msra.mxu0 0
    %718 = vmatprep.subr.bf16.mxu0 0
    %719 = vmatpush2.bf16.xpose.msra.mxu0 0
    %720 = vmatprep.subr.bf16.mxu0 0
    %721 = vmatpush2.bf16.xpose.msra.mxu0 0
    %722 = vmatprep.subr.bf16.mxu0 0
    %723 = vmatpush2.bf16.xpose.msra.mxu0 0
    %724 = vmatprep.mubr.bf16.mxu0 0
    %725 = vmatmul.mubr.bf16.gmra.mxu0 %v685
    %v726 = vpop.f32.mrf.mxu0
    %v727 = vadd.f32 %v690, %v726
    %v728 = vpop.f32.mrf.mxu0
    %v729 = vpop.f32.mrf.mxu0
    %v730 = vpop.f32.mrf.mxu0
    %731 = vdwg.mxu0
    %vm732 = vcmask 326656
    %733 = vst.msk [vmem:[#allocation7] sm:$0xff] %vm732, %v727
    %s734 = smul.u32 0, 40
    %v735 = vlaneseq
    %v736 = vand.u32 %v735, 127
    %v737 = vstv %s734
    %v738 = vadd.s32 %v737, %v736
    %vm739 = vcmp.lt.s32.totalorder %v738, 40
    %v740 = vsel %vm739, %v727, -inf
    %v741 = vsel %vm732, %v740, -inf
    %742 = vmax.xlane.f32.xlu0 %v741
    %v743 = vpop.xlane.xlu0 %742
    %v744 = vsub.f32 %v740, %v743
    %v745 = vmul.f32 %v744, 1.442695
    %v746 = vpow.pop %v745
    %v747 = vsel %vm732, %v746, 0.0
    %748 = vadd.xlane.f32.xlu0 %v747
    %v749 = vpop.xlane.xlu0 %748
    %vm750 = vcmask 7168
    %v751 = vsel %vm750, %v743, %v749
    %vm752 = vcmask 15360
    %753 = vst.msk [vmem:[%s6] sm:$0xff] %vm752, %v751
    // Predicated region
    $region30: #{tpu_custom_call.1} parent=1 // pred_check
      _
    $region31: #{tpu_custom_call.1} parent=1 // pred_check_branch
      %755 = sbr.rel (0) target = $region33
    $region32: #{tpu_custom_call.1} parent=1 // pred_region
      %s757 = ssub.s32 128, 128
      %758 = vsyncadd [#allocation4], %s757
      %s760 = sshll.u32 [#allocation7], 4
      %s761 = int_to_ptr.vmem [resolvable:$true] %s760
      %763 = dma.vmem_to_hbm [thread:$0]  %s761, 128, %s5, [#allocation4]
    $region33: #{tpu_custom_call.1} parent=1 // pred_fallthru
      _
    // Predicated region
    $region34: #{tpu_custom_call.1} parent=1 // pred_check
      _
    $region35: #{tpu_custom_call.1} parent=1 // pred_check_branch
      %765 = sbr.rel (0) target = $region37
    $region36: #{tpu_custom_call.1} parent=1 // pred_region
      _
    $region37: #{tpu_custom_call.1} parent=1 // pred_fallthru
      _
    // Predicated region
    $region38: #{tpu_custom_call.1} parent=1 // pred_check
      _
    $region39: #{tpu_custom_call.1} parent=1 // pred_check_branch
      %767 = sbr.rel (0) target = $region41
    $region40: #{tpu_custom_call.1} parent=1 // pred_region
      %768 = dma.done [#allocation4], 128
    $region41: #{tpu_custom_call.1} parent=1 // pred_fallthru
      _
    // Predicated region
    $region42: #{tpu_custom_call.1} parent=1 // pred_check
      _
    $region43: #{tpu_custom_call.1} parent=1 // pred_check_branch
      %770 = sbr.rel (0) target = $region45
    $region44: #{tpu_custom_call.1} parent=1 // pred_region
      _
    $region45: #{tpu_custom_call.1} parent=1 // pred_fallthru
      _
    %771 = vsyncpa [#allocation3], 1
    %772 = vsyncpa [#allocation6], 1
    %773 = vsyncpa [#allocation4], 1

// kernel: tpu_custom_call.1
$region0: #{tpu_custom_call.1}
  #allocation0 [shape = 'u32[]', space=smem, size = 0x4, offset = 0x4, fixed_abs, tag = 'smem constant byte address 0x4 - core index']
  #allocation1 [shape = 'u32[144,128]{1,0:T(1,128)}', space=vmem, size = 0x12000, scoped, tag = 'internal scratch']
  %s0 = inlined_call_operand.hbm [shape: bf16[40,500], index: 0, kind: input, shape index: {}]
  %s1 = inlined_call_operand.hbm [shape: bf16[500,256], index: 1, kind: input, shape index: {}]
  %s2 = inlined_call_operand.vmem [shape: f32[1,256], index: 2, kind: input, shape index: {}]
  %s3 = inlined_call_operand.vmem [shape: bf16[8,128], index: 3, kind: input, shape index: {}]
  %s4 = inlined_call_operand.vmem [shape: f32[8,1], index: 4, kind: input, shape index: {}]
  %s5 = inlined_call_operand.hbm [shape: f32[8,40], index: 5, kind: output, shape index: {0}]
  %s6 = inlined_call_operand.vmem [shape: f32[1,8,2], index: 6, kind: output, shape index: {1}]
  %7 = xla_tuple %s5, %s6
  %s8 = sld [smem:[#allocation0]]
  $region46: #{tpu_custom_call.1} parent=0
    _
  %s10 = ssub.s32 1, %s8
  %s11 = scalar_select 0, %s10, %s8
  $region1: #{tpu_custom_call.1} parent=0
    #allocation2 [shape = 'u8[40960]{0}', space=vmem, size = 0xa000, scoped, tag = 'input window, operand 0, single buffered']
    #allocation3 [shape = 's32[1]{0}', space=sflag, size = 0x4, scoped, tag = 'scoped memory for tpu_custom_call.1']
    #allocation4 [shape = 's32[1]{0}', space=sflag, size = 0x4, scoped, tag = 'scoped memory for tpu_custom_call.1']
    #allocation5 [shape = 'u8[258048]{0}', space=vmem, size = 0x3f000, scoped, tag = 'input window, operand 1, single buffered']
    #allocation6 [shape = 's32[1]{0}', space=sflag, size = 0x4, scoped, tag = 'scoped memory for tpu_custom_call.1']
    #allocation7 [shape = 'u8[4096]{0}', space=vmem, size = 0x1000, scoped, tag = 'output window, operand 0, single buffered']
    %12 = vsyncpa [#allocation3], 0
    %13 = vsyncpa [#allocation6], 0
    %14 = vsyncpa [#allocation4], 0
    // Predicated region
    $region2: #{tpu_custom_call.1} parent=1 // pred_check
      _
    $region3: #{tpu_custom_call.1} parent=1 // pred_check_branch
      %16 = sbr.rel (0) target = $region5
    $region4: #{tpu_custom_call.1} parent=1 // pred_region
      %s18 = ssub.s32 1280, 1280
      %19 = vsyncadd [#allocation3], %s18
      %s20 = sshll.u32 [#allocation2], 4
      %s21 = int_to_ptr.vmem [resolvable:$true] %s20
      %26 = dma.hbm_to_vmem [thread:$0]  %s0, 1280, %s21, [#allocation3], 256, 256, 16
    $region5: #{tpu_custom_call.1} parent=1 // pred_fallthru
      _
    // Predicated region
    $region6: #{tpu_custom_call.1} parent=1 // pred_check
      _
    $region7: #{tpu_custom_call.1} parent=1 // pred_check_branch
      %28 = sbr.rel (0) target = $region9
    $region8: #{tpu_custom_call.1} parent=1 // pred_region
      %s30 = ssub.s32 8064, 8064
      %31 = vsyncadd [#allocation6], %s30
      %s32 = sshll.u32 [#allocation5], 4
      %s33 = int_to_ptr.vmem [resolvable:$true] %s32
      %38 = dma.hbm_to_vmem [thread:$0]  %s1, 8064, %s33, [#allocation6], 128, 128, 8
    $region9: #{tpu_custom_call.1} parent=1 // pred_fallthru
      _
    // Predicated region
    $region10: #{tpu_custom_call.1} parent=1 // pred_check
      _
    $region11: #{tpu_custom_call.1} parent=1 // pred_check_branch
      %40 = sbr.rel (0) target = $region13
    $region12: #{tpu_custom_call.1} parent=1 // pred_region
      _
    $region13: #{tpu_custom_call.1} parent=1 // pred_fallthru
      _
    // Predicated region
    $region14: #{tpu_custom_call.1} parent=1 // pred_check
      _
    $region15: #{tpu_custom_call.1} parent=1 // pred_check_branch
      %42 = sbr.rel (0) target = $region17
    $region16: #{tpu_custom_call.1} parent=1 // pred_region
      _
    $region17: #{tpu_custom_call.1} parent=1 // pred_fallthru
      _
    // Predicated region
    $region18: #{tpu_custom_call.1} parent=1 // pred_check
      _
    $region19: #{tpu_custom_call.1} parent=1 // pred_check_branch
      %44 = sbr.rel (0) target = $region21
    $region20: #{tpu_custom_call.1} parent=1 // pred_region
      _
    $region21: #{tpu_custom_call.1} parent=1 // pred_fallthru
      _
    // Predicated region
    $region22: #{tpu_custom_call.1} parent=1 // pred_check
      _
    $region23: #{tpu_custom_call.1} parent=1 // pred_check_branch
      %46 = sbr.rel (0) target = $region25
    $region24: #{tpu_custom_call.1} parent=1 // pred_region
      %47 = dma.done [#allocation3], 1280
    $region25: #{tpu_custom_call.1} parent=1 // pred_fallthru
      _
    // Predicated region
    $region26: #{tpu_custom_call.1} parent=1 // pred_check
      _
    $region27: #{tpu_custom_call.1} parent=1 // pred_check_branch
      %49 = sbr.rel (0) target = $region29
    $region28: #{tpu_custom_call.1} parent=1 // pred_region
      %50 = dma.done [#allocation6], 8064
    $region29: #{tpu_custom_call.1} parent=1 // pred_fallthru
      _
    %v52 = vld [vmem:[#allocation2] sm:$0xff]
    %v53 = vld [vmem:[#allocation2 + $0x8] sm:$0xff]
    %v54 = vld [vmem:[#allocation2 + $0x10] sm:$0xff]
    %v55 = vld [vmem:[#allocation2 + $0x18] sm:$0xff]
    %v56 = vld [vmem:[#allocation2 + $0x20] sm:$0xff]
    %v57 = vld [vmem:[#allocation2 + $0x28] sm:$0xff]
    %v58 = vld [vmem:[#allocation2 + $0x30] sm:$0xff]
    %v59 = vld [vmem:[#allocation2 + $0x38] sm:$0xff]
    %v60 = vld [vmem:[#allocation2 + $0x40] sm:$0xff]
    %v61 = vld [vmem:[#allocation2 + $0x48] sm:$0xff]
    %v62 = vld [vmem:[#allocation5] sm:$0xff]
    %v63 = vld [vmem:[#allocation5 + $0x8] sm:$0xff]
    %v64 = vld [vmem:[#allocation5 + $0x10] sm:$0xff]
    %v65 = vld [vmem:[#allocation5 + $0x18] sm:$0xff]
    %v66 = vld [vmem:[#allocation5 + $0x20] sm:$0xff]
    %v67 = vld [vmem:[#allocation5 + $0x28] sm:$0xff]
    %v68 = vld [vmem:[#allocation5 + $0x30] sm:$0xff]
    %v69 = vld [vmem:[#allocation5 + $0x38] sm:$0xff]
    %v70 = vld [vmem:[#allocation5 + $0x40] sm:$0xff]
    %v71 = vld [vmem:[#allocation5 + $0x48] sm:$0xff]
    %v72 = vld [vmem:[#allocation5 + $0x50] sm:$0xff]
    %v73 = vld [vmem:[#allocation5 + $0x58] sm:$0xff]
    %v74 = vld [vmem:[#allocation5 + $0x60] sm:$0xff]
    %v75 = vld [vmem:[#allocation5 + $0x68] sm:$0xff]
    %v76 = vld [vmem:[#allocation5 + $0x70] sm:$0xff]
    %v77 = vld [vmem:[#allocation5 + $0x78] sm:$0xff]
    %v78 = vld [vmem:[#allocation5 + $0x80] sm:$0xff]
    %v79 = vld [vmem:[#allocation5 + $0x88] sm:$0xff]
    %v80 = vld [vmem:[#allocation5 + $0x90] sm:$0xff]
    %v81 = vld [vmem:[#allocation5 + $0x98] sm:$0xff]
    %v82 = vld [vmem:[#allocation5 + $0xa0] sm:$0xff]
    %v83 = vld [vmem:[#allocation5 + $0xa8] sm:$0xff]
    %v84 = vld [vmem:[#allocation5 + $0xb0] sm:$0xff]
    %v85 = vld [vmem:[#allocation5 + $0xb8] sm:$0xff]
    %v86 = vld [vmem:[#allocation5 + $0xc0] sm:$0xff]
    %v87 = vld [vmem:[#allocation5 + $0xc8] sm:$0xff]
    %v88 = vld [vmem:[#allocation5 + $0xd0] sm:$0xff]
    %v89 = vld [vmem:[#allocation5 + $0xd8] sm:$0xff]
    %v90 = vld [vmem:[#allocation5 + $0xe0] sm:$0xff]
    %v91 = vld [vmem:[#allocation5 + $0xe8] sm:$0xff]
    %v92 = vld [vmem:[#allocation5 + $0xf0] sm:$0xff]
    %v93 = vld [vmem:[#allocation5 + $0xf8] sm:$0xff]
    %v94 = vld [vmem:[#allocation5 + $0x100] sm:$0xff]
    %v95 = vld [vmem:[#allocation5 + $0x108] sm:$0xff]
    %v96 = vld [vmem:[#allocation5 + $0x110] sm:$0xff]
    %v97 = vld [vmem:[#allocation5 + $0x118] sm:$0xff]
    %v98 = vld [vmem:[#allocation5 + $0x120] sm:$0xff]
    %v99 = vld [vmem:[#allocation5 + $0x128] sm:$0xff]
    %v100 = vld [vmem:[#allocation5 + $0x130] sm:$0xff]
    %v101 = vld [vmem:[#allocation5 + $0x138] sm:$0xff]
    %v102 = vld [vmem:[#allocation5 + $0x140] sm:$0xff]
    %v103 = vld [vmem:[#allocation5 + $0x148] sm:$0xff]
    %v104 = vld [vmem:[#allocation5 + $0x150] sm:$0xff]
    %v105 = vld [vmem:[#allocation5 + $0x158] sm:$0xff]
    %v106 = vld [vmem:[#allocation5 + $0x160] sm:$0xff]
    %v107 = vld [vmem:[#allocation5 + $0x168] sm:$0xff]
    %v108 = vld [vmem:[#allocation5 + $0x170] sm:$0xff]
    %v109 = vld [vmem:[#allocation5 + $0x178] sm:$0xff]
    %v110 = vld [vmem:[#allocation5 + $0x180] sm:$0xff]
    %v111 = vld [vmem:[#allocation5 + $0x188] sm:$0xff]
    %v112 = vld [vmem:[#allocation5 + $0x190] sm:$0xff]
    %v113 = vld [vmem:[#allocation5 + $0x198] sm:$0xff]
    %v114 = vld [vmem:[#allocation5 + $0x1a0] sm:$0xff]
    %v115 = vld [vmem:[#allocation5 + $0x1a8] sm:$0xff]
    %v116 = vld [vmem:[#allocation5 + $0x1b0] sm:$0xff]
    %v117 = vld [vmem:[#allocation5 + $0x1b8] sm:$0xff]
    %v118 = vld [vmem:[#allocation5 + $0x1c0] sm:$0xff]
    %v119 = vld [vmem:[#allocation5 + $0x1c8] sm:$0xff]
    %v120 = vld [vmem:[#allocation5 + $0x1d0] sm:$0xff]
    %v121 = vld [vmem:[#allocation5 + $0x1d8] sm:$0xff]
    %v122 = vld [vmem:[#allocation5 + $0x1e0] sm:$0xff]
    %v123 = vld [vmem:[#allocation5 + $0x1e8] sm:$0xff]
    %v124 = vld [vmem:[#allocation5 + $0x1f0] sm:$0x33]
    %v125 = vld [vmem:[%s2] sm:$0x3]
    %v127 = vlaneseq
    %v128 = vshrl.u32 %v127, 7
    %v129 = vsub.s32 0, %v128
    %v130 = vrot.slane %v125, %v129
    %v131 = vlaneseq
    %v132 = vshrl.u32 %v131, 7
    %v133 = vsub.s32 1, %v132
    %v134 = vrot.slane %v125, %v133
    %v147 = vunpack.c.l.b16 %v52
    %v148 = vunpack.c.h.b16 %v52
    %v149 = vunpack.c.l.b16 %v53
    %v150 = vunpack.c.h.b16 %v53
    %v151 = vunpack.c.l.b16 %v54
    %v152 = vunpack.c.h.b16 %v54
    %v153 = vunpack.c.l.b16 %v55
    %v154 = vunpack.c.h.b16 %v55
    %v155 = vunpack.c.l.b16 %v56
    %v156 = vunpack.c.h.b16 %v56
    %v157 = vunpack.c.l.b16 %v57
    %v158 = vunpack.c.h.b16 %v57
    %v159 = vunpack.c.l.b16 %v58
    %v160 = vunpack.c.h.b16 %v58
    %v161 = vunpack.c.l.b16 %v59
    %v162 = vunpack.c.h.b16 %v59
    %v163 = vunpack.c.l.b16 %v60
    %v164 = vunpack.c.h.b16 %v60
    %v165 = vunpack.c.l.b16 %v61
    %v166 = vunpack.c.h.b16 %v61
    %v167 = vpack.c.b16 %v151, %v147
    %v168 = vpack.c.b16 %v152, %v148
    %v169 = vpack.c.b16 %v153, %v149
    %v170 = vpack.c.b16 %v154, %v150
    %v171 = vpack.c.b16 %v159, %v155
    %v172 = vpack.c.b16 %v160, %v156
    %v173 = vpack.c.b16 %v161, %v157
    %v174 = vpack.c.b16 %v162, %v158
    %v175 = vpack.c.b16 %v163, %v163
    %v176 = vpack.c.b16 %v164, %v164
    %v177 = vpack.c.b16 %v165, %v165
    %v178 = vpack.c.b16 %v166, %v166
    %v251 = vunpack.c.l.b16 %v62
    %v252 = vunpack.c.h.b16 %v62
    %v253 = vunpack.c.l.b16 %v63
    %v254 = vunpack.c.h.b16 %v63
    %v255 = vunpack.c.l.b16 %v64
    %v256 = vunpack.c.h.b16 %v64
    %v257 = vunpack.c.l.b16 %v65
    %v258 = vunpack.c.h.b16 %v65
    %v259 = vunpack.c.l.b16 %v66
    %v260 = vunpack.c.h.b16 %v66
    %v261 = vunpack.c.l.b16 %v67
    %v262 = vunpack.c.h.b16 %v67
    %v263 = vunpack.c.l.b16 %v68
    %v264 = vunpack.c.h.b16 %v68
    %v265 = vunpack.c.l.b16 %v69
    %v266 = vunpack.c.h.b16 %v69
    %v267 = vunpack.c.l.b16 %v70
    %v268 = vunpack.c.h.b16 %v70
    %v269 = vunpack.c.l.b16 %v71
    %v270 = vunpack.c.h.b16 %v71
    %v271 = vunpack.c.l.b16 %v72
    %v272 = vunpack.c.h.b16 %v72
    %v273 = vunpack.c.l.b16 %v73
    %v274 = vunpack.c.h.b16 %v73
    %v275 = vunpack.c.l.b16 %v74
    %v276 = vunpack.c.h.b16 %v74
    %v277 = vunpack.c.l.b16 %v75
    %v278 = vunpack.c.h.b16 %v75
    %v279 = vunpack.c.l.b16 %v76
    %v280 = vunpack.c.h.b16 %v76
    %v281 = vunpack.c.l.b16 %v77
    %v282 = vunpack.c.h.b16 %v77
    %v283 = vunpack.c.l.b16 %v78
    %v284 = vunpack.c.h.b16 %v78
    %v285 = vunpack.c.l.b16 %v79
    %v286 = vunpack.c.h.b16 %v79
    %v287 = vunpack.c.l.b16 %v80
    %v288 = vunpack.c.h.b16 %v80
    %v289 = vunpack.c.l.b16 %v81
    %v290 = vunpack.c.h.b16 %v81
    %v291 = vunpack.c.l.b16 %v82
    %v292 = vunpack.c.h.b16 %v82
    %v293 = vunpack.c.l.b16 %v83
    %v294 = vunpack.c.h.b16 %v83
    %v295 = vunpack.c.l.b16 %v84
    %v296 = vunpack.c.h.b16 %v84
    %v297 = vunpack.c.l.b16 %v85
    %v298 = vunpack.c.h.b16 %v85
    %v299 = vunpack.c.l.b16 %v86
    %v300 = vunpack.c.h.b16 %v86
    %v301 = vunpack.c.l.b16 %v87
    %v302 = vunpack.c.h.b16 %v87
    %v303 = vunpack.c.l.b16 %v88
    %v304 = vunpack.c.h.b16 %v88
    %v305 = vunpack.c.l.b16 %v89
    %v306 = vunpack.c.h.b16 %v89
    %v307 = vunpack.c.l.b16 %v90
    %v308 = vunpack.c.h.b16 %v90
    %v309 = vunpack.c.l.b16 %v91
    %v310 = vunpack.c.h.b16 %v91
    %v311 = vunpack.c.l.b16 %v92
    %v312 = vunpack.c.h.b16 %v92
    %v313 = vunpack.c.l.b16 %v93
    %v314 = vunpack.c.h.b16 %v93
    %v315 = vunpack.c.l.b16 %v94
    %v316 = vunpack.c.h.b16 %v94
    %v317 = vunpack.c.l.b16 %v95
    %v318 = vunpack.c.h.b16 %v95
    %v319 = vunpack.c.l.b16 %v96
    %v320 = vunpack.c.h.b16 %v96
    %v321 = vunpack.c.l.b16 %v97
    %v322 = vunpack.c.h.b16 %v97
    %v323 = vunpack.c.l.b16 %v98
    %v324 = vunpack.c.h.b16 %v98
    %v325 = vunpack.c.l.b16 %v99
    %v326 = vunpack.c.h.b16 %v99
    %v327 = vunpack.c.l.b16 %v100
    %v328 = vunpack.c.h.b16 %v100
    %v329 = vunpack.c.l.b16 %v101
    %v330 = vunpack.c.h.b16 %v101
    %v331 = vunpack.c.l.b16 %v102
    %v332 = vunpack.c.h.b16 %v102
    %v333 = vunpack.c.l.b16 %v103
    %v334 = vunpack.c.h.b16 %v103
    %v335 = vunpack.c.l.b16 %v104
    %v336 = vunpack.c.h.b16 %v104
    %v337 = vunpack.c.l.b16 %v105
    %v338 = vunpack.c.h.b16 %v105
    %v339 = vunpack.c.l.b16 %v106
    %v340 = vunpack.c.h.b16 %v106
    %v341 = vunpack.c.l.b16 %v107
    %v342 = vunpack.c.h.b16 %v107
    %v343 = vunpack.c.l.b16 %v108
    %v344 = vunpack.c.h.b16 %v108
    %v345 = vunpack.c.l.b16 %v109
    %v346 = vunpack.c.h.b16 %v109
    %v347 = vunpack.c.l.b16 %v110
    %v348 = vunpack.c.h.b16 %v110
    %v349 = vunpack.c.l.b16 %v111
    %v350 = vunpack.c.h.b16 %v111
    %v351 = vunpack.c.l.b16 %v112
    %v352 = vunpack.c.h.b16 %v112
    %v353 = vunpack.c.l.b16 %v113
    %v354 = vunpack.c.h.b16 %v113
    %v355 = vunpack.c.l.b16 %v114
    %v356 = vunpack.c.h.b16 %v114
    %v357 = vunpack.c.l.b16 %v115
    %v358 = vunpack.c.h.b16 %v115
    %v359 = vunpack.c.l.b16 %v116
    %v360 = vunpack.c.h.b16 %v116
    %v361 = vunpack.c.l.b16 %v117
    %v362 = vunpack.c.h.b16 %v117
    %v363 = vunpack.c.l.b16 %v118
    %v364 = vunpack.c.h.b16 %v118
    %v365 = vunpack.c.l.b16 %v119
    %v366 = vunpack.c.h.b16 %v119
    %v367 = vunpack.c.l.b16 %v120
    %v368 = vunpack.c.h.b16 %v120
    %v369 = vunpack.c.l.b16 %v121
    %v370 = vunpack.c.h.b16 %v121
    %v371 = vunpack.c.l.b16 %v122
    %v372 = vunpack.c.h.b16 %v122
    %v373 = vunpack.c.l.b16 %v123
    %v374 = vunpack.c.h.b16 %v123
    %v375 = vunpack.c.l.b16 %v124
    %v376 = vunpack.c.h.b16 %v124
    %v377 = vpack.c.b16 %v253, %v251
    %v378 = vpack.c.b16 %v254, %v252
    %v379 = vpack.c.b16 %v257, %v255
    %v380 = vpack.c.b16 %v258, %v256
    %v381 = vpack.c.b16 %v261, %v259
    %v382 = vpack.c.b16 %v262, %v260
    %v383 = vpack.c.b16 %v265, %v263
    %v384 = vpack.c.b16 %v266, %v264
    %v385 = vpack.c.b16 %v269, %v267
    %v386 = vpack.c.b16 %v270, %v268
    %v387 = vpack.c.b16 %v273, %v271
    %v388 = vpack.c.b16 %v274, %v272
    %v389 = vpack.c.b16 %v277, %v275
    %v390 = vpack.c.b16 %v278, %v276
    %v391 = vpack.c.b16 %v281, %v279
    %v392 = vpack.c.b16 %v282, %v280
    %v393 = vpack.c.b16 %v285, %v283
    %v394 = vpack.c.b16 %v286, %v284
    %v395 = vpack.c.b16 %v289, %v287
    %v396 = vpack.c.b16 %v290, %v288
    %v397 = vpack.c.b16 %v293, %v291
    %v398 = vpack.c.b16 %v294, %v292
    %v399 = vpack.c.b16 %v297, %v295
    %v400 = vpack.c.b16 %v298, %v296
    %v401 = vpack.c.b16 %v301, %v299
    %v402 = vpack.c.b16 %v302, %v300
    %v403 = vpack.c.b16 %v305, %v303
    %v404 = vpack.c.b16 %v306, %v304
    %v405 = vpack.c.b16 %v309, %v307
    %v406 = vpack.c.b16 %v310, %v308
    %v407 = vpack.c.b16 %v313, %v311
    %v408 = vpack.c.b16 %v314, %v312
    %v409 = vpack.c.b16 %v317, %v315
    %v410 = vpack.c.b16 %v318, %v316
    %v411 = vpack.c.b16 %v321, %v319
    %v412 = vpack.c.b16 %v322, %v320
    %v413 = vpack.c.b16 %v325, %v323
    %v414 = vpack.c.b16 %v326, %v324
    %v415 = vpack.c.b16 %v329, %v327
    %v416 = vpack.c.b16 %v330, %v328
    %v417 = vpack.c.b16 %v333, %v331
    %v418 = vpack.c.b16 %v334, %v332
    %v419 = vpack.c.b16 %v337, %v335
    %v420 = vpack.c.b16 %v338, %v336
    %v421 = vpack.c.b16 %v341, %v339
    %v422 = vpack.c.b16 %v342, %v340
    %v423 = vpack.c.b16 %v345, %v343
    %v424 = vpack.c.b16 %v346, %v344
    %v425 = vpack.c.b16 %v349, %v347
    %v426 = vpack.c.b16 %v350, %v348
    %v427 = vpack.c.b16 %v353, %v351
    %v428 = vpack.c.b16 %v354, %v352
    %v429 = vpack.c.b16 %v357, %v355
    %v430 = vpack.c.b16 %v358, %v356
    %v431 = vpack.c.b16 %v361, %v359
    %v432 = vpack.c.b16 %v362, %v360
    %v433 = vpack.c.b16 %v365, %v363
    %v434 = vpack.c.b16 %v366, %v364
    %v435 = vpack.c.b16 %v369, %v367
    %v436 = vpack.c.b16 %v370, %v368
    %v437 = vpack.c.b16 %v373, %v371
    %v438 = vpack.c.b16 %v374, %v372
    %v439 = vpack.c.b16 %v375, %v375
    %v440 = vpack.c.b16 %v376, %v376
    %vm503 = vcmask 949248
    %v505 = vsel %vm503, %v170, 0
    %v508 = vsel %vm503, %v174, 0
    %v511 = vsel %vm503, %v178, 0
    %vm513 = vcmask 1041408
    %v515 = vsel %vm513, %v439, 0
    %v518 = vsel %vm513, %v440, 0
    %520 = vmatprep.subr.bf16.mxu0 %v392
    %521 = vmatpush1.bf16.msra.mxu0 %v391
    %522 = vmatprep.subr.bf16.mxu0 %v390
    %523 = vmatpush1.bf16.msra.mxu0 %v389
    %524 = vmatprep.subr.bf16.mxu0 %v388
    %525 = vmatpush1.bf16.msra.mxu0 %v387
    %526 = vmatprep.subr.bf16.mxu0 %v386
    %527 = vmatpush1.bf16.msra.mxu0 %v385
    %528 = vmatprep.subr.bf16.mxu0 %v384
    %529 = vmatpush1.bf16.msra.mxu0 %v383
    %530 = vmatprep.subr.bf16.mxu0 %v382
    %531 = vmatpush1.bf16.msra.mxu0 %v381
    %532 = vmatprep.subr.bf16.mxu0 %v380
    %533 = vmatpush1.bf16.msra.mxu0 %v379
    %534 = vmatprep.subr.bf16.mxu0 %v378
    %535 = vmatpush1.bf16.msra.mxu0 %v377
    %536 = vmatprep.subr.bf16.mxu0 %v408
    %537 = vmatpush2.bf16.msra.mxu0 %v407
    %538 = vmatprep.subr.bf16.mxu0 %v406
    %539 = vmatpush2.bf16.msra.mxu0 %v405
    %540 = vmatprep.subr.bf16.mxu0 %v404
    %541 = vmatpush2.bf16.msra.mxu0 %v403
    %542 = vmatprep.subr.bf16.mxu0 %v402
    %543 = vmatpush2.bf16.msra.mxu0 %v401
    %544 = vmatprep.subr.bf16.mxu0 %v400
    %545 = vmatpush2.bf16.msra.mxu0 %v399
    %546 = vmatprep.subr.bf16.mxu0 %v398
    %547 = vmatpush2.bf16.msra.mxu0 %v397
    %548 = vmatprep.subr.bf16.mxu0 %v396
    %549 = vmatpush2.bf16.msra.mxu0 %v395
    %550 = vmatprep.subr.bf16.mxu0 %v394
    %551 = vmatpush2.bf16.msra.mxu0 %v393
    %552 = vmatprep.mubr.bf16.mxu0 %v168
    %553 = vmatmul.mubr.bf16.gmra.mxu0 %v167
    %v554 = vpop.f32.mrf.mxu0
    %v555 = vadd.f32 %v130, %v554
    %v556 = vpop.f32.mrf.mxu0
    %v557 = vadd.f32 %v134, %v556
    %v558 = vpop.f32.mrf.mxu0
    %v559 = vadd.f32 %v130, %v558
    %v560 = vpop.f32.mrf.mxu0
    %v561 = vadd.f32 %v134, %v560
    %562 = vmatprep.mubr.bf16.mxu0 %v172
    %563 = vmatmul.mubr.bf16.gmra.mxu0 %v171
    %v564 = vpop.f32.mrf.mxu0
    %v565 = vadd.f32 %v130, %v564
    %v566 = vpop.f32.mrf.mxu0
    %v567 = vadd.f32 %v134, %v566
    %v568 = vpop.f32.mrf.mxu0
    %v569 = vadd.f32 %v130, %v568
    %v570 = vpop.f32.mrf.mxu0
    %v571 = vadd.f32 %v134, %v570
    %572 = vmatprep.mubr.bf16.mxu0 %v176
    %573 = vmatmul.mubr.bf16.gmra.mxu0 %v175
    %v574 = vpop.f32.mrf.mxu0
    %v575 = vadd.f32 %v130, %v574
    %v576 = vpop.f32.mrf.mxu0
    %v577 = vadd.f32 %v134, %v576
    %v578 = vpop.f32.mrf.mxu0
    %v579 = vpop.f32.mrf.mxu0
    %580 = vdwg.mxu0
    %581 = vmatprep.subr.bf16.mxu0 %v424
    %582 = vmatpush1.bf16.msra.mxu0 %v423
    %583 = vmatprep.subr.bf16.mxu0 %v422
    %584 = vmatpush1.bf16.msra.mxu0 %v421
    %585 = vmatprep.subr.bf16.mxu0 %v420
    %586 = vmatpush1.bf16.msra.mxu0 %v419
    %587 = vmatprep.subr.bf16.mxu0 %v418
    %588 = vmatpush1.bf16.msra.mxu0 %v417
    %589 = vmatprep.subr.bf16.mxu0 %v416
    %590 = vmatpush1.bf16.msra.mxu0 %v415
    %591 = vmatprep.subr.bf16.mxu0 %v414
    %592 = vmatpush1.bf16.msra.mxu0 %v413
    %593 = vmatprep.subr.bf16.mxu0 %v412
    %594 = vmatpush1.bf16.msra.mxu0 %v411
    %595 = vmatprep.subr.bf16.mxu0 %v410
    %596 = vmatpush1.bf16.msra.mxu0 %v409
    %597 = vmatprep.subr.bf16.mxu0 %v518
    %598 = vmatpush2.bf16.msra.mxu0 %v515
    %599 = vmatprep.subr.bf16.mxu0 %v438
    %600 = vmatpush2.bf16.msra.mxu0 %v437
    %601 = vmatprep.subr.bf16.mxu0 %v436
    %602 = vmatpush2.bf16.msra.mxu0 %v435
    %603 = vmatprep.subr.bf16.mxu0 %v434
    %604 = vmatpush2.bf16.msra.mxu0 %v433
    %605 = vmatprep.subr.bf16.mxu0 %v432
    %606 = vmatpush2.bf16.msra.mxu0 %v431
    %607 = vmatprep.subr.bf16.mxu0 %v430
    %608 = vmatpush2.bf16.msra.mxu0 %v429
    %609 = vmatprep.subr.bf16.mxu0 %v428
    %610 = vmatpush2.bf16.msra.mxu0 %v427
    %611 = vmatprep.subr.bf16.mxu0 %v426
    %612 = vmatpush2.bf16.msra.mxu0 %v425
    %613 = vmatprep.mubr.bf16.mxu0 %v505
    %614 = vmatmul.mubr.bf16.gmra.mxu0 %v169
    %v615 = vpop.f32.mrf.mxu0
    %v616 = vadd.f32 %v555, %v615
    %v617 = vpop.f32.mrf.mxu0
    %v618 = vadd.f32 %v557, %v617
    %v619 = vpop.f32.mrf.mxu0
    %v620 = vadd.f32 %v559, %v619
    %v621 = vpop.f32.mrf.mxu0
    %v622 = vadd.f32 %v561, %v621
    %623 = vmatprep.mubr.bf16.mxu0 %v508
    %624 = vmatmul.mubr.bf16.gmra.mxu0 %v173
    %v625 = vpop.f32.mrf.mxu0
    %v626 = vadd.f32 %v565, %v625
    %v627 = vpop.f32.mrf.mxu0
    %v628 = vadd.f32 %v567, %v627
    %v629 = vpop.f32.mrf.mxu0
    %v630 = vadd.f32 %v569, %v629
    %v631 = vpop.f32.mrf.mxu0
    %v632 = vadd.f32 %v571, %v631
    %633 = vmatprep.mubr.bf16.mxu0 %v511
    %634 = vmatmul.mubr.bf16.gmra.mxu0 %v177
    %v635 = vpop.f32.mrf.mxu0
    %v636 = vadd.f32 %v575, %v635
    %v637 = vpop.f32.mrf.mxu0
    %v638 = vadd.f32 %v577, %v637
    %v639 = vpop.f32.mrf.mxu0
    %v640 = vpop.f32.mrf.mxu0
    %641 = vdwg.mxu0
    %v642 = vtanh.pop %v616
    %v643 = vtanh.pop %v620
    %v644 = vtanh.pop %v626
    %v645 = vtanh.pop %v630
    %v646 = vtanh.pop %v636
    %v647 = vxor.u32 %v618, 2147483648
    %v648 = vxor.u32 %v622, 2147483648
    %v649 = vxor.u32 %v628, 2147483648
    %v650 = vxor.u32 %v632, 2147483648
    %v651 = vxor.u32 %v638, 2147483648
    %v652 = vmul.f32 %v647, 1.442695
    %v653 = vpow.pop %v652
    %v654 = vmul.f32 %v648, 1.442695
    %v655 = vpow.pop %v654
    %v656 = vmul.f32 %v649, 1.442695
    %v657 = vpow.pop %v656
    %v658 = vmul.f32 %v650, 1.442695
    %v659 = vpow.pop %v658
    %v660 = vmul.f32 %v651, 1.442695
    %v661 = vpow.pop %v660
    %v662 = vadd.f32 %v653, 1.0
    %v663 = vadd.f32 %v655, 1.0
    %v664 = vadd.f32 %v657, 1.0
    %v665 = vadd.f32 %v659, 1.0
    %v666 = vadd.f32 %v661, 1.0
    %v667 = vrcp.pop %v662
    %v668 = vmul.f32 1.0, %v667
    %v669 = vrcp.pop %v663
    %v670 = vmul.f32 1.0, %v669
    %v671 = vrcp.pop %v664
    %v672 = vmul.f32 1.0, %v671
    %v673 = vrcp.pop %v665
    %v674 = vmul.f32 1.0, %v673
    %v675 = vrcp.pop %v666
    %v676 = vmul.f32 1.0, %v675
    %v677 = vmul.f32 %v642, %v668
    %v678 = vmul.f32 %v643, %v670
    %v679 = vmul.f32 %v644, %v672
    %v680 = vmul.f32 %v645, %v674
    %v681 = vmul.f32 %v646, %v676
    %v682 = vpack.c.bf16 %v678, %v677
    %v683 = vpack.c.bf16 %v680, %v679
    %v684 = vpack.c.bf16 %v681, %v681
    %v685 = vld [vmem:[%s3] sm:$0xf]
    %v686 = vld [vmem:[%s4] sm:$0xff]
    %688 = vset.pattern.permute.xlu0 0
    %689 = vperm.xlu0 %688, %v686
    %v690 = vpop.permute.xlu0 %689
    %692 = vmatprep.subr.bf16.mxu0 0
    %693 = vmatpush1.bf16.xpose.msra.mxu0 0
    %694 = vmatprep.subr.bf16.mxu0 0
    %695 = vmatpush1.bf16.xpose.msra.mxu0 0
    %696 = vmatprep.subr.bf16.mxu0 0
    %697 = vmatpush1.bf16.xpose.msra.mxu0 0
    %698 = vmatprep.subr.bf16.mxu0 0
    %699 = vmatpush1.bf16.xpose.msra.mxu0 0
    %700 = vmatprep.subr.bf16.mxu0 0
    %701 = vmatpush1.bf16.xpose.msra.mxu0 0
    %702 = vmatprep.subr.bf16.mxu0 0
    %703 = vmatpush1.bf16.xpose.msra.mxu0 %v684
    %704 = vmatprep.subr.bf16.mxu0 0
    %705 = vmatpush1.bf16.xpose.msra.mxu0 %v683
    %706 = vmatprep.subr.bf16.mxu0 0
    %707 = vmatpush1.bf16.xpose.msra.mxu0 %v682
    %708 = vmatprep.subr.bf16.mxu0 0
    %709 = vmatpush2.bf16.xpose.msra.mxu0 0
    %710 = vmatprep.subr.bf16.mxu0 0
    %711 = vmatpush2.bf16.xpose.msra.mxu0 0
    %712 = vmatprep.subr.bf16.mxu0 0
    %713 = vmatpush2.bf16.xpose.msra.mxu0 0
    %714 = vmatprep.subr.bf16.mxu0 0
    %715 = vmatpush2.bf16.xpose.msra.mxu0 0
    %716 = vmatprep.subr.bf16.mxu0 0
    %717 = vmatpush2.bf16.xpose.msra.mxu0 0
    %718 = vmatprep.subr.bf16.mxu0 0
    %719 = vmatpush2.bf16.xpose.msra.mxu0 0
    %720 = vmatprep.subr.bf16.mxu0 0
    %721 = vmatpush2.bf16.xpose.msra.mxu0 0
    %722 = vmatprep.subr.bf16.mxu0 0
    %723 = vmatpush2.bf16.xpose.msra.mxu0 0
    %724 = vmatprep.mubr.bf16.mxu0 0
    %725 = vmatmul.mubr.bf16.gmra.mxu0 %v685
    %v726 = vpop.f32.mrf.mxu0
    %v727 = vadd.f32 %v690, %v726
    %v728 = vpop.f32.mrf.mxu0
    %v729 = vpop.f32.mrf.mxu0
    %v730 = vpop.f32.mrf.mxu0
    %731 = vdwg.mxu0
    %vm732 = vcmask 326656
    %733 = vst.msk [vmem:[#allocation7] sm:$0xff] %vm732, %v727
    %s734 = smul.u32 0, 40
    %v735 = vlaneseq
    %v736 = vand.u32 %v735, 127
    %v737 = vstv %s734
    %v738 = vadd.s32 %v737, %v736
    %vm739 = vcmp.lt.s32.totalorder %v738, 40
    %v740 = vsel %vm739, %v727, -inf
    %v741 = vsel %vm732, %v740, -inf
    %742 = vmax.xlane.f32.xlu0 %v741
    %v743 = vpop.xlane.xlu0 %742
    %v744 = vsub.f32 %v740, %v743
    %v745 = vmul.f32 %v744, 1.442695
    %v746 = vpow.pop %v745
    %v747 = vsel %vm732, %v746, 0.0
    %748 = vadd.xlane.f32.xlu0 %v747
    %v749 = vpop.xlane.xlu0 %748
    %vm750 = vcmask 7168
    %v751 = vsel %vm750, %v743, %v749
    %vm752 = vcmask 15360
    %753 = vst.msk [vmem:[%s6] sm:$0xff] %vm752, %v751
    // Predicated region
    $region30: #{tpu_custom_call.1} parent=1 // pred_check
      _
    $region31: #{tpu_custom_call.1} parent=1 // pred_check_branch
      %755 = sbr.rel (0) target = $region33
    $region32: #{tpu_custom_call.1} parent=1 // pred_region
      %s757 = ssub.s32 128, 128
      %758 = vsyncadd [#allocation4], %s757
      %s760 = sshll.u32 [#allocation7], 4
      %s761 = int_to_ptr.vmem [resolvable:$true] %s760
      %763 = dma.vmem_to_hbm [thread:$0]  %s761, 128, %s5, [#allocation4]
    $region33: #{tpu_custom_call.1} parent=1 // pred_fallthru
      _
    // Predicated region
    $region34: #{tpu_custom_call.1} parent=1 // pred_check
      _
    $region35: #{tpu_custom_call.1} parent=1 // pred_check_branch
      %765 = sbr.rel (0) target = $region37
    $region36: #{tpu_custom_call.1} parent=1 // pred_region
      _
    $region37: #{tpu_custom_call.1} parent=1 // pred_fallthru
      _
    // Predicated region
    $region38: #{tpu_custom_call.1} parent=1 // pred_check
      _
    $region39: #{tpu_custom_call.1} parent=1 // pred_check_branch
      %767 = sbr.rel (0) target = $region41
    $region40: #{tpu_custom_call.1} parent=1 // pred_region
      %768 = dma.done [#allocation4], 128
    $region41: #{tpu_custom_call.1} parent=1 // pred_fallthru
      _
    // Predicated region
    $region42: #{tpu_custom_call.1} parent=1 // pred_check
      _
    $region43: #{tpu_custom_call.1} parent=1 // pred_check_branch
      %770 = sbr.rel (0) target = $region45
    $region44: #{tpu_custom_call.1} parent=1 // pred_region
      _
    $region45: #{tpu_custom_call.1} parent=1 // pred_fallthru
      _
    %771 = vsyncpa [#allocation3], 1
    %772 = vsyncpa [#allocation6], 1
    %773 = vsyncpa [#allocation4], 1

</llo_original>
